<compile_context>
chip_gen: v7x
topology: tpu7x:2x2x1
jax: 0.10.0
libtpu: 0.0.40
codegen_flags: <defaults>
</compile_context>

<pallas_src>
import re
import numpy as np
import jax
import jax.numpy as jnp
from jax.experimental import pallas as pl
from jax.experimental.pallas import tpu as pltpu

EPS = 1e-15
LANE = 128
SUB = 8
NEG_BIG = -1e30          # finite "-inf" sentinel (avoids 0 * inf NaNs)


def _round_up(v, m):
    return ((v + m - 1) // m) * m


def _pad2d(a, rows, cols):
    r, c = a.shape
    return jnp.pad(a, ((0, rows - r), (0, cols - c)))


# ---------------------------------------------------------------------------------
# Kernel
# ---------------------------------------------------------------------------------
def gml_kernel(gid_ref, nvalid_ref, first_ref, last_ref,          # SMEM scalar prefetch
               x_ref, g_ref, mu_ref, nhiv_ref, fold_ref, w1t_ref, w2row_ref,
               out_ref,
               m_sc, l_sc, acc_sc):
    t = pl.program_id(0)
    tile_n = x_ref.shape[0]
    nvalid = nvalid_ref[t]

    # NOTE: the single grid axis MUST stay "arbitrary" and the out index_map must be
    # invariant across the tiles of one graph: the pooled result lives in scratch and
    # is written only on the last tile of each graph (resident-accumulator pattern).
    @pl.when(first_ref[t] == 1)
    def _():
        m_sc[...] = jnp.full_like(m_sc, NEG_BIG)
        l_sc[...] = jnp.zeros_like(l_sc)
        acc_sc[...] = jnp.zeros_like(acc_sc)

    row = jax.lax.broadcasted_iota(jnp.int32, (tile_n, 1), 0)
    valid = row < nvalid                                             # (tile_n, 1)

    # out = x @ g   (MXU; bf16 feeds when compute_dtype is bf16, f32 accumulate)
    out = jnp.dot(x_ref[...], g_ref[...],
                  preferred_element_type=jnp.float32)                # (tn, KMp) f32

    # Gaussian-mixture weighting in one full-width elementwise pass; the division is
    # hoisted: nhiv = -0.5 / (EPS + sigma^2) is precomputed in the wrapper.  This pass
    # runs in gaussian_dtype (bf16 on v6e/v7x: native bf16 VPU/EUP; f32 on v5e).
    gdt = mu_ref.dtype
    og = out.astype(gdt)
    d = og - mu_ref[...]
    og = og * jnp.exp(d * d * nhiv_ref[...])                         # (tn, KMp)

    # Fold the K kernels:  H[:, m] = sum_k og[:, k*M + m]  ==  og @ fold   (MXU)
    H = jnp.dot(og.astype(fold_ref.dtype), fold_ref[...],
                preferred_element_type=jnp.float32)                  # (tn, Mp) f32

    # Attention scores s = w2 @ tanh(w1 @ H^T): tanh-matmul on the MXU, then a VPU
    # multiply + lane reduction against the (1, HIDp) w2 row (no lane-1 matmul).
    a = jnp.tanh(jnp.dot(H.astype(w1t_ref.dtype), w1t_ref[...],
                         preferred_element_type=jnp.float32))        # (tn, HIDp) f32
    s = jnp.sum(a * w2row_ref[...], axis=-1, keepdims=True)          # (tn, 1)
    s = jnp.where(valid, s, NEG_BIG)

    # Online (streaming) segment softmax + weighted sum, f32 accumulators in scratch.
    m_prev = m_sc[...]
    m_new = jnp.maximum(m_prev, jnp.max(s, axis=0, keepdims=True))
    alpha = jnp.exp(m_prev - m_new)
    p = jnp.where(valid, jnp.exp(s - m_new), 0.0)                    # (tn, 1)
    l_sc[...] = alpha * l_sc[...] + jnp.sum(p, axis=0, keepdims=True)
    # scatter_add(S * H, batch)  ==  p^T @ H   (contract over nodes, MXU)
    acc_sc[...] = alpha * acc_sc[...] + jax.lax.dot_general(
        p, H, (((0,), (0,)), ((), ())), preferred_element_type=jnp.float32)
    m_sc[...] = m_new

    # Finalize on the last tile of the graph: lane-dense (8, Mp) unmasked store.
    @pl.when(last_ref[t] == 1)
    def _():
        res = acc_sc[...] * (1.0 / (l_sc[...] + 1e-16))              # (1, Mp)
        out_ref[...] = jnp.broadcast_to(res, out_ref.shape).astype(out_ref.dtype)


# ---------------------------------------------------------------------------------
# Hardware-derived defaults
# ---------------------------------------------------------------------------------
def _vmem_capacity_bytes():
    try:
        info = pltpu.get_tpu_info()
        cap = getattr(info, "vmem_capacity_bytes", None)
        if cap:
            return int(cap)
    except Exception:
        pass
    return 128 * 1024 * 1024     # v5e / v6e


def _chip_generation():
    try:
        kind = str(jax.devices()[0].device_kind)
        m = re.search(r"(\d+)", kind)
        if m:
            return int(m.group(1))
    except Exception:
        pass
    return 0


def _pick_tile_n(max_graph_nodes, Fp, KMp, Mp, HIDp, cd_bytes, gd_bytes, vmem_limit):
    # 256-512 row node tiles keep the MXU full and amortize the ~600-cycle grid-step
    # overhead; halve on v7x (64 MiB physical VMEM).  Clamp to the largest graph.
    base = 512 if _vmem_capacity_bytes() >= 96 * (1 << 20) else 256
    tile = min(base, _round_up(max(int(max_graph_nodes), SUB), SUB))

    def footprint(tn):
        x_blk = 2 * tn * Fp * cd_bytes                              # double-buffered x
        weights = (Fp * KMp + KMp * Mp + Mp * HIDp) * cd_bytes \
                  + 2 * KMp * gd_bytes + HIDp * 4                   # single-buffered
        interm = tn * (KMp * (4 + gd_bytes) + (Mp + HIDp) * 4 + 16)
        return x_blk + weights + interm + 2 * SUB * Mp * 4

    while tile > SUB and footprint(tile) > 0.6 * vmem_limit:
        tile = max(SUB, _round_up(tile // 2, SUB))
    return tile


# ---------------------------------------------------------------------------------
# Host-side segmentation plan (compute once per data-loader batch and reuse)
# ---------------------------------------------------------------------------------
def build_segment_plan(batch, num_graphs, tile_n):
    """Sorted/tiled layout metadata for a node->graph assignment.

    This mirrors the torch module reading data.batch; compute it once per batch
    (outside the hot path) and pass it to gml_forward(plan=...) to avoid repeated
    host work and retraces."""
    assert tile_n % SUB == 0
    batch_np = np.asarray(batch).astype(np.int64)
    N = batch_np.shape[0]
    counts = np.bincount(batch_np, minlength=num_graphs).astype(np.int64)
    tiles_b = np.maximum(-(-counts // tile_n), 1)       # >= 1 tile even for empty graphs
    num_tiles = int(tiles_b.sum())
    blk_off = np.zeros(num_graphs, np.int64)
    blk_off[1:] = np.cumsum(tiles_b)[:-1]

    gid_t = np.repeat(np.arange(num_graphs, dtype=np.int64), tiles_b)
    local_t = np.concatenate([np.arange(tb, dtype=np.int64) for tb in tiles_b])
    nvalid_t = np.clip(counts[gid_t] - local_t * tile_n, 0, tile_n)
    first_t = (local_t == 0).astype(np.int32)
    last_t = (local_t == tiles_b[gid_t] - 1).astype(np.int32)

    order = np.argsort(batch_np, kind="stable")
    graph_start = np.zeros(num_graphs, np.int64)
    graph_start[1:] = np.cumsum(counts)[:-1]
    rank = np.arange(N, dtype=np.int64) - graph_start[batch_np[order]]
    dest = (blk_off[batch_np[order]] * tile_n + rank).astype(np.int32)

    return {
        "tile_n": tile_n,
        "num_tiles": num_tiles,
        "n_rows": num_tiles * tile_n,
        "order": order.astype(np.int32),
        "dest": dest,
        "gid_t": gid_t.astype(np.int32),
        "nvalid_t": nvalid_t.astype(np.int32),
        "first_t": first_t,
        "last_t": last_t,
    }


# ---------------------------------------------------------------------------------
# Forward wrapper
# ---------------------------------------------------------------------------------
def gml_forward(x, g, mu, sigma, w1, w2, batch, num_graphs, *,
                tile_n=None, compute_dtype=None, gaussian_dtype=None, plan=None):
    """GML.forward + AttnPooling (module defaults root_weight=False, bias=False).

    compute_dtype: MXU feed dtype (default bf16 -- every TPU MXU takes bf16).
    gaussian_dtype: dtype of the elementwise Gaussian/exp pass (default bf16 on
    v6e/v7x which have bf16 VPU/EUP, f32 on v5e and older).
    tile_n: node-tile rows; default derives 512 (128-MiB VMEM chips) / 256 (v7x),
    clamped to the largest graph and to the scoped-VMEM budget.
    """
    N, F = x.shape
    K, M = mu.shape
    hid = w1.shape[0]
    KM = K * M

    if compute_dtype is None:
        compute_dtype = jnp.bfloat16
    if gaussian_dtype is None:
        gaussian_dtype = jnp.bfloat16 if _chip_generation() >= 6 else jnp.float32
    cd, gd = compute_dtype, gaussian_dtype
    cd_bytes = jnp.finfo(cd).bits // 8
    gd_bytes = jnp.finfo(gd).bits // 8

    Fp = _round_up(F, LANE)
    KMp = _round_up(KM, LANE)
    Mp = _round_up(M, LANE)
    HIDp = _round_up(hid, LANE)

    vmem_limit = int(min(_vmem_capacity_bytes() // 2, 64 * (1 << 20)))

    if plan is None:
        counts = np.bincount(np.asarray(batch), minlength=num_graphs)
        if tile_n is None:
            tile_n = _pick_tile_n(counts.max() if counts.size else SUB,
                                  Fp, KMp, Mp, HIDp, cd_bytes, gd_bytes, vmem_limit)
        plan = build_segment_plan(batch, num_graphs, tile_n)
    tile_n = plan["tile_n"]
    num_tiles = plan["num_tiles"]

    # ---- glue: sorted / tile-padded node features + lane-dense padded parameters ----
    x_src = jnp.pad(jnp.asarray(x, jnp.float32)[jnp.asarray(plan["order"])],
                    ((0, 0), (0, Fp - F))).astype(cd)
    x_pad = jnp.zeros((plan["n_rows"], Fp), cd).at[jnp.asarray(plan["dest"])].set(x_src)

    g_pad = _pad2d(jnp.asarray(g, jnp.float32), Fp, KMp).astype(cd)            # (Fp, KMp)
    mu_row = _pad2d(jnp.asarray(mu, jnp.float32).reshape(1, KM), 1, KMp).astype(gd)
    nhiv_row = _pad2d((-0.5 / (EPS + jnp.asarray(sigma, jnp.float32) ** 2)
                       ).reshape(1, KM), 1, KMp).astype(gd)                    # (1, KMp)
    fold = _pad2d(jnp.tile(jnp.eye(M, dtype=jnp.float32), (K, 1)),
                  KMp, Mp).astype(cd)                                          # (KMp, Mp)
    w1t_pad = _pad2d(jnp.asarray(w1, jnp.float32).T, Mp, HIDp).astype(cd)      # (Mp, HIDp)
    w2row = _pad2d(jnp.asarray(w2, jnp.float32), 1, HIDp)                      # (1, HIDp) f32

    operands = (jnp.asarray(plan["gid_t"]), jnp.asarray(plan["nvalid_t"]),
                jnp.asarray(plan["first_t"]), jnp.asarray(plan["last_t"]),
                x_pad, g_pad, mu_row, nhiv_row, fold, w1t_pad, w2row)

    def build(single_buffer_weights):
        idx0 = lambda t, gid, nv, fi, la: (0, 0)

        def const_spec(shape):
            if single_buffer_weights:
                # Grid-invariant operand: fetched once, no double buffering (frees VMEM
                # for a bigger node tile; the dominant lever on v7x's 64 MiB).
                return pl.BlockSpec(shape, idx0, pipeline_mode=pl.Buffered(1))
            return pl.BlockSpec(shape, idx0)

        grid_spec = pltpu.PrefetchScalarGridSpec(
            num_scalar_prefetch=4,
            grid=(num_tiles,),
            in_specs=[
                pl.BlockSpec((tile_n, Fp), lambda t, gid, nv, fi, la: (t, 0)),
                const_spec((Fp, KMp)),
                const_spec((1, KMp)),
                const_spec((1, KMp)),
                const_spec((KMp, Mp)),
                const_spec((Mp, HIDp)),
                const_spec((1, HIDp)),
            ],
            out_specs=pl.BlockSpec((SUB, Mp), lambda t, gid, nv, fi, la: (gid[t], 0)),
            scratch_shapes=[
                pltpu.VMEM((1, 1), jnp.float32),      # running max   m
                pltpu.VMEM((1, 1), jnp.float32),      # running sum   l
                pltpu.VMEM((1, Mp), jnp.float32),     # running weighted sum
            ],
        )
        return pl.pallas_call(
            gml_kernel,
            out_shape=jax.ShapeDtypeStruct((num_graphs * SUB, Mp), jnp.float32),
            grid_spec=grid_spec,
            compiler_params=pltpu.CompilerParams(
                # Flattened tile axis carries the resident accumulator -> "arbitrary".
                dimension_semantics=("arbitrary",),
                vmem_limit_bytes=vmem_limit,
            ),
        )

    try:
        out_padded = jax.block_until_ready(build(True)(*operands))
    except Exception:
        # Installed JAX rejected pipeline_mode=pl.Buffered(1): fall back to defaults.
        out_padded = jax.block_until_ready(build(False)(*operands))

    return out_padded.reshape(num_graphs, SUB, Mp)[:, 0, :M]


# ---------------------------------------------------------------------------------
# Pure-JAX reference (correctness check)
# ---------------------------------------------------------------------------------
def gml_reference(x, g, mu, sigma, w1, w2, batch, num_graphs):
    N = x.shape[0]
    K, M = mu.shape
    out = (x @ g).reshape(N, K, M)
    gauss = jnp.exp(-0.5 * (out - mu[None]) ** 2 / (EPS + sigma[None] ** 2))
    H = jnp.sum(out * gauss, axis=1)                        # (N, M)
    sN = (w2 @ jnp.tanh(w1 @ H.T))[0]                       # (N,)
    smax = jax.ops.segment_max(sN, batch, num_graphs)
    e = jnp.exp(sN - smax[batch])
    esum = jax.ops.segment_sum(e, batch, num_graphs)
    S = e / (esum[batch] + 1e-16)
    return jax.ops.segment_sum(S[:, None] * H, batch, num_graphs)


def glorot(key, shape):
    fan_in, fan_out = shape[-1], shape[0]
    a = jnp.sqrt(6.0 / (fan_in + fan_out))
    return jax.random.uniform(key, shape, jnp.float32, -a, a)


if __name__ == "__main__":
    # Small shapes consistent with the module
    F_ = 32     # user_out_feats
    M_ = 16     # group_in_feats
    K_ = 4      # kernel_size
    HID = 8     # att_feats

    key = jax.random.PRNGKey(0)
    k_x, k_g, k_mu, k_sg, k_w1, k_w2 = jax.random.split(key, 6)

    g = glorot(k_g, (F_, K_ * M_))
    mu = glorot(k_mu, (K_, M_))
    sigma = glorot(k_sg, (K_, M_))
    w1 = glorot(k_w1, (HID, M_))
    w2 = glorot(k_w2, (1, HID))

    # --- test 1: small batch, fp32 end-to-end, multi-tile graph (tile_n=8) ----------
    N1, B1 = 16, 2
    x1 = jax.random.normal(k_x, (N1, F_), jnp.float32)
    batch1 = jnp.array([0] * 9 + [1] * 7, dtype=jnp.int32)
    out1 = jax.block_until_ready(
        gml_forward(x1, g, mu, sigma, w1, w2, batch1, B1, tile_n=8,
                    compute_dtype=jnp.float32, gaussian_dtype=jnp.float32))
    ref1 = gml_reference(x1, g, mu, sigma, w1, w2, batch1, B1)
    assert out1.shape == (B1, M_)
    assert jnp.allclose(out1, ref1, atol=1e-4, rtol=1e-4), (out1, ref1)

    # --- test 2: skewed graph sizes + an empty graph, plan reuse, fp32 --------------
    B2 = 3
    counts2 = [150, 0, 145]
    N2 = sum(counts2)
    x2 = jax.random.normal(jax.random.PRNGKey(1), (N2, F_), jnp.float32)
    batch2 = jnp.asarray(np.repeat(np.arange(B2), counts2).astype(np.int32))
    plan2 = build_segment_plan(batch2, B2, tile_n=64)   # built once, reused below
    out2 = jax.block_until_ready(
        gml_forward(x2, g, mu, sigma, w1, w2, batch2, B2, plan=plan2,
                    compute_dtype=jnp.float32, gaussian_dtype=jnp.float32))
    ref2 = gml_reference(x2, g, mu, sigma, w1, w2, batch2, B2)
    assert out2.shape == (B2, M_)
    assert jnp.allclose(out2, ref2, atol=2e-3, rtol=2e-3), (out2, ref2)

    # --- test 3: bf16 MXU feeds + bf16 Gaussian pass, tolerance vs f32 reference ----
    out3 = jax.block_until_ready(
        gml_forward(x2, g, mu, sigma, w1, w2, batch2, B2, plan=plan2,
                    compute_dtype=jnp.bfloat16, gaussian_dtype=jnp.bfloat16))
    assert out3.shape == (B2, M_)
    assert bool(jnp.all(jnp.isfinite(out3)))
    rel = float(jnp.linalg.norm(out3 - ref2) / (jnp.linalg.norm(ref2) + 1e-12))
    assert rel < 0.1, rel

    print("KERNEL_OK")
</pallas_src>

<mosaic_0001>
module attributes {stable_mosaic.version = 11 : i64} {
  func.func @gml_kernel(%arg0: i32, %arg1: memref<3xi32, #tpu.memory_space<smem>>, %arg2: memref<3xi32, #tpu.memory_space<smem>>, %arg3: memref<3xi32, #tpu.memory_space<smem>>, %arg4: memref<3xi32, #tpu.memory_space<smem>>, %arg5: memref<8x128xf32, #tpu.memory_space<vmem>>, %arg6: memref<128x128xf32, #tpu.memory_space<vmem>>, %arg7: memref<1x128xf32, #tpu.memory_space<vmem>>, %arg8: memref<1x128xf32, #tpu.memory_space<vmem>>, %arg9: memref<128x128xf32, #tpu.memory_space<vmem>>, %arg10: memref<128x128xf32, #tpu.memory_space<vmem>>, %arg11: memref<1x128xf32, #tpu.memory_space<vmem>>, %arg12: memref<8x128xf32, #tpu.memory_space<vmem>>, %arg13: memref<1x1xf32, #tpu.memory_space<vmem>>, %arg14: memref<1x1xf32, #tpu.memory_space<vmem>>, %arg15: memref<1x128xf32, #tpu.memory_space<vmem>>) attributes {dimension_semantics = [#tpu.dimension_semantics<arbitrary>], iteration_bounds = array<i64: 3>, scalar_prefetch = 4 : i64, scratch_operands = 3 : i64, tpu.core_type = #tpu.core_type<tc>, window_params = [{transform_indices = @transform_0, window_bounds = array<i64: 8, 128>}, {pipeline_mode = #tpu.pipeline_mode<synchronous>, transform_indices = @transform_1, window_bounds = array<i64: 128, 128>}, {pipeline_mode = #tpu.pipeline_mode<synchronous>, transform_indices = @transform_2, window_bounds = array<i64: 1, 128>}, {pipeline_mode = #tpu.pipeline_mode<synchronous>, transform_indices = @transform_3, window_bounds = array<i64: 1, 128>}, {pipeline_mode = #tpu.pipeline_mode<synchronous>, transform_indices = @transform_4, window_bounds = array<i64: 128, 128>}, {pipeline_mode = #tpu.pipeline_mode<synchronous>, transform_indices = @transform_5, window_bounds = array<i64: 128, 128>}, {pipeline_mode = #tpu.pipeline_mode<synchronous>, transform_indices = @transform_6, window_bounds = array<i64: 1, 128>}, {transform_indices = @transform_7, window_bounds = array<i64: 8, 128>}]} {
    %0 = arith.index_cast %arg0 : i32 to index
    %1 = memref.load %arg2[%0] : memref<3xi32, #tpu.memory_space<smem>>
    %2 = arith.index_cast %arg0 : i32 to index
    %3 = memref.load %arg3[%2] : memref<3xi32, #tpu.memory_space<smem>>
    %c1_i32 = arith.constant 1 : i32
    %4 = arith.cmpi eq, %3, %c1_i32 : i32
    %5 = arith.extui %4 : i1 to i32
    %c0_i32 = arith.constant 0 : i32
    %6 = arith.cmpi ne, %5, %c0_i32 : i32
    scf.if %6 {
      %cst_35 = arith.constant -1.000000e+30 : f32
      %63 = vector.broadcast %cst_35 : f32 to vector<1x1xf32>
      %c0_36 = arith.constant 0 : index
      %c0_37 = arith.constant 0 : index
      %64 = vector.load %arg13[%c0_36, %c0_37] : memref<1x1xf32, #tpu.memory_space<vmem>>, vector<1x1xf32>
      tpu.vector_store %arg13[%c0_36, %c0_37], %63 {strides = array<i32>} : memref<1x1xf32, #tpu.memory_space<vmem>>, vector<1x1xf32>,
      %cst_38 = arith.constant 0.000000e+00 : f32
      %65 = vector.broadcast %cst_38 : f32 to vector<1x1xf32>
      %c0_39 = arith.constant 0 : index
      %c0_40 = arith.constant 0 : index
      %66 = vector.load %arg14[%c0_39, %c0_40] : memref<1x1xf32, #tpu.memory_space<vmem>>, vector<1x1xf32>
      tpu.vector_store %arg14[%c0_39, %c0_40], %65 {strides = array<i32>} : memref<1x1xf32, #tpu.memory_space<vmem>>, vector<1x1xf32>,
      %cst_41 = arith.constant 0.000000e+00 : f32
      %67 = vector.broadcast %cst_41 : f32 to vector<1x128xf32>
      %c0_42 = arith.constant 0 : index
      %c0_43 = arith.constant 0 : index
      %68 = vector.load %arg15[%c0_42, %c0_43] : memref<1x128xf32, #tpu.memory_space<vmem>>, vector<1x128xf32>
      tpu.vector_store %arg15[%c0_42, %c0_43], %67 {strides = array<i32>} : memref<1x128xf32, #tpu.memory_space<vmem>>, vector<1x128xf32>,
    } else {
    }
    %7 = tpu.iota {dimensions = array<i32: 0>} : vector<8x1xi32>
    %8 = vector.broadcast %1 : i32 to vector<8x1xi32>
    %9 = arith.cmpi slt, %7, %8 : vector<8x1xi32>
    %c0 = arith.constant 0 : index
    %c0_0 = arith.constant 0 : index
    %10 = vector.load %arg5[%c0, %c0_0] : memref<8x128xf32, #tpu.memory_space<vmem>>, vector<8x128xf32>
    %c0_1 = arith.constant 0 : index
    %c0_2 = arith.constant 0 : index
    %11 = vector.load %arg6[%c0_1, %c0_2] : memref<128x128xf32, #tpu.memory_space<vmem>>, vector<128x128xf32>
    %cst = arith.constant dense<0.000000e+00> : vector<8x128xf32>
    %12 = tpu.matmul %10, %11, %cst {dimension_numbers = #tpu.dot_dimension_numbers<[1], [0], [0], [1], [0, 0, 1, 1], [], []>} : vector<8x128xf32>, vector<128x128xf32>, vector<8x128xf32> -> vector<8x128xf32>
    %c0_3 = arith.constant 0 : index
    %c0_4 = arith.constant 0 : index
    %13 = vector.load %arg7[%c0_3, %c0_4] : memref<1x128xf32, #tpu.memory_space<vmem>>, vector<1x128xf32>
    %14 = vector.broadcast %13 : vector<1x128xf32> to vector<8x128xf32>
    %15 = arith.subf %12, %14 : vector<8x128xf32>
    %16 = arith.mulf %15, %15 : vector<8x128xf32>
    %c0_5 = arith.constant 0 : index
    %c0_6 = arith.constant 0 : index
    %17 = vector.load %arg8[%c0_5, %c0_6] : memref<1x128xf32, #tpu.memory_space<vmem>>, vector<1x128xf32>
    %18 = vector.broadcast %17 : vector<1x128xf32> to vector<8x128xf32>
    %19 = arith.mulf %16, %18 : vector<8x128xf32>
    %20 = math.exp %19 : vector<8x128xf32>
    %21 = arith.mulf %12, %20 : vector<8x128xf32>
    %c0_7 = arith.constant 0 : index
    %c0_8 = arith.constant 0 : index
    %22 = vector.load %arg9[%c0_7, %c0_8] : memref<128x128xf32, #tpu.memory_space<vmem>>, vector<128x128xf32>
    %cst_9 = arith.constant dense<0.000000e+00> : vector<8x128xf32>
    %23 = tpu.matmul %21, %22, %cst_9 {dimension_numbers = #tpu.dot_dimension_numbers<[1], [0], [0], [1], [0, 0, 1, 1], [], []>} : vector<8x128xf32>, vector<128x128xf32>, vector<8x128xf32> -> vector<8x128xf32>
    %c0_10 = arith.constant 0 : index
    %c0_11 = arith.constant 0 : index
    %24 = vector.load %arg10[%c0_10, %c0_11] : memref<128x128xf32, #tpu.memory_space<vmem>>, vector<128x128xf32>
    %cst_12 = arith.constant dense<0.000000e+00> : vector<8x128xf32>
    %25 = tpu.matmul %23, %24, %cst_12 {dimension_numbers = #tpu.dot_dimension_numbers<[1], [0], [0], [1], [0, 0, 1, 1], [], []>} : vector<8x128xf32>, vector<128x128xf32>, vector<8x128xf32> -> vector<8x128xf32>
    %26 = math.tanh %25 : vector<8x128xf32>
    %c0_13 = arith.constant 0 : index
    %c0_14 = arith.constant 0 : index
    %27 = vector.load %arg11[%c0_13, %c0_14] : memref<1x128xf32, #tpu.memory_space<vmem>>, vector<1x128xf32>
    %28 = vector.broadcast %27 : vector<1x128xf32> to vector<8x128xf32>
    %29 = arith.mulf %26, %28 : vector<8x128xf32>
    %cst_15 = arith.constant dense<0.000000e+00> : vector<8xf32>
    %30 = vector.multi_reduction <add>, %29, %cst_15 [1] : vector<8x128xf32> to vector<8xf32>
    %31 = vector.shape_cast %30 : vector<8xf32> to vector<8x1xf32>
    %cst_16 = arith.constant -1.000000e+30 : f32
    %32 = vector.broadcast %cst_16 : f32 to vector<8x1xf32>
    %33 = arith.select %9, %31, %32 : vector<8x1xi1>, vector<8x1xf32>
    %c0_17 = arith.constant 0 : index
    %c0_18 = arith.constant 0 : index
    %34 = vector.load %arg13[%c0_17, %c0_18] : memref<1x1xf32, #tpu.memory_space<vmem>>, vector<1x1xf32>
    %cst_19 = arith.constant dense<0xFF800000> : vector<1xf32>
    %35 = vector.multi_reduction <maximumf>, %33, %cst_19 [0] : vector<8x1xf32> to vector<1xf32>
    %36 = vector.shape_cast %35 : vector<1xf32> to vector<1x1xf32>
    %37 = arith.maximumf %34, %36 : vector<1x1xf32>
    %38 = arith.subf %34, %37 : vector<1x1xf32>
    %39 = math.exp %38 : vector<1x1xf32>
    %40 = vector.broadcast %37 : vector<1x1xf32> to vector<8x1xf32>
    %41 = arith.subf %33, %40 : vector<8x1xf32>
    %42 = math.exp %41 : vector<8x1xf32>
    %cst_20 = arith.constant 0.000000e+00 : f32
    %43 = vector.broadcast %cst_20 : f32 to vector<8x1xf32>
    %44 = arith.select %9, %42, %43 : vector<8x1xi1>, vector<8x1xf32>
    %c0_21 = arith.constant 0 : index
    %c0_22 = arith.constant 0 : index
    %45 = vector.load %arg14[%c0_21, %c0_22] : memref<1x1xf32, #tpu.memory_space<vmem>>, vector<1x1xf32>
    %46 = arith.mulf %39, %45 : vector<1x1xf32>
    %cst_23 = arith.constant dense<0.000000e+00> : vector<1xf32>
    %47 = vector.multi_reduction <add>, %44, %cst_23 [0] : vector<8x1xf32> to vector<1xf32>
    %48 = vector.shape_cast %47 : vector<1xf32> to vector<1x1xf32>
    %49 = arith.addf %46, %48 : vector<1x1xf32>
    %c0_24 = arith.constant 0 : index
    %c0_25 = arith.constant 0 : index
    %50 = vector.load %arg14[%c0_24, %c0_25] : memref<1x1xf32, #tpu.memory_space<vmem>>, vector<1x1xf32>
    tpu.vector_store %arg14[%c0_24, %c0_25], %49 {strides = array<i32>} : memref<1x1xf32, #tpu.memory_space<vmem>>, vector<1x1xf32>,
    %c0_26 = arith.constant 0 : index
    %c0_27 = arith.constant 0 : index
    %51 = vector.load %arg15[%c0_26, %c0_27] : memref<1x128xf32, #tpu.memory_space<vmem>>, vector<1x128xf32>
    %52 = vector.broadcast %39 : vector<1x1xf32> to vector<1x128xf32>
    %53 = arith.mulf %52, %51 : vector<1x128xf32>
    %cst_28 = arith.constant dense<0.000000e+00> : vector<1x128xf32>
    %54 = tpu.matmul %44, %23, %cst_28 {dimension_numbers = #tpu.dot_dimension_numbers<[0], [0], [1], [1], [0, 1, 1, 1], [], []>} : vector<8x1xf32>, vector<8x128xf32>, vector<1x128xf32> -> vector<1x128xf32>
    %55 = arith.addf %53, %54 : vector<1x128xf32>
    %c0_29 = arith.constant 0 : index
    %c0_30 = arith.constant 0 : index
    %56 = vector.load %arg15[%c0_29, %c0_30] : memref<1x128xf32, #tpu.memory_space<vmem>>, vector<1x128xf32>
    tpu.vector_store %arg15[%c0_29, %c0_30], %55 {strides = array<i32>} : memref<1x128xf32, #tpu.memory_space<vmem>>, vector<1x128xf32>,
    %c0_31 = arith.constant 0 : index
    %c0_32 = arith.constant 0 : index
    %57 = vector.load %arg13[%c0_31, %c0_32] : memref<1x1xf32, #tpu.memory_space<vmem>>, vector<1x1xf32>
    tpu.vector_store %arg13[%c0_31, %c0_32], %37 {strides = array<i32>} : memref<1x1xf32, #tpu.memory_space<vmem>>, vector<1x1xf32>,
    %58 = arith.index_cast %arg0 : i32 to index
    %59 = memref.load %arg4[%58] : memref<3xi32, #tpu.memory_space<smem>>
    %c1_i32_33 = arith.constant 1 : i32
    %60 = arith.cmpi eq, %59, %c1_i32_33 : i32
    %61 = arith.extui %60 : i1 to i32
    %c0_i32_34 = arith.constant 0 : i32
    %62 = arith.cmpi ne, %61, %c0_i32_34 : i32
    scf.if %62 {
      %c0_35 = arith.constant 0 : index
      %c0_36 = arith.constant 0 : index
      %63 = vector.load %arg15[%c0_35, %c0_36] : memref<1x128xf32, #tpu.memory_space<vmem>>, vector<1x128xf32>
      %c0_37 = arith.constant 0 : index
      %c0_38 = arith.constant 0 : index
      %64 = vector.load %arg14[%c0_37, %c0_38] : memref<1x1xf32, #tpu.memory_space<vmem>>, vector<1x1xf32>
      %cst_39 = arith.constant 1.000000e-16 : f32
      %65 = vector.broadcast %cst_39 : f32 to vector<1x1xf32>
      %66 = arith.addf %64, %65 : vector<1x1xf32>
      %cst_40 = arith.constant 1.000000e+00 : f32
      %67 = vector.broadcast %cst_40 : f32 to vector<1x1xf32>
      %68 = arith.divf %67, %66 : vector<1x1xf32>
      %69 = vector.broadcast %68 : vector<1x1xf32> to vector<1x128xf32>
      %70 = arith.mulf %63, %69 : vector<1x128xf32>
      %71 = vector.shape_cast %70 : vector<1x128xf32> to vector<1x128xf32>
      %72 = vector.broadcast %71 : vector<1x128xf32> to vector<8x128xf32>
      %c0_41 = arith.constant 0 : index
      %c0_42 = arith.constant 0 : index
      %73 = vector.load %arg12[%c0_41, %c0_42] : memref<8x128xf32, #tpu.memory_space<vmem>>, vector<8x128xf32>
      tpu.vector_store %arg12[%c0_41, %c0_42], %72 {strides = array<i32>} : memref<8x128xf32, #tpu.memory_space<vmem>>, vector<8x128xf32>,
    } else {
    }
    return
  }
  func.func @transform_0(%arg0: i32, %arg1: memref<3xi32, #tpu.memory_space<smem>>, %arg2: memref<3xi32, #tpu.memory_space<smem>>, %arg3: memref<3xi32, #tpu.memory_space<smem>>, %arg4: memref<3xi32, #tpu.memory_space<smem>>) -> (i32, i32) {
    %c0_i32 = arith.constant 0 : i32
    %c0_i32_0 = arith.constant 0 : i32
    return %arg0, %c0_i32 : i32, i32
  }
  func.func @transform_1(%arg0: i32, %arg1: memref<3xi32, #tpu.memory_space<smem>>, %arg2: memref<3xi32, #tpu.memory_space<smem>>, %arg3: memref<3xi32, #tpu.memory_space<smem>>, %arg4: memref<3xi32, #tpu.memory_space<smem>>) -> (i32, i32) {
    %c0_i32 = arith.constant 0 : i32
    %c0_i32_0 = arith.constant 0 : i32
    %c0_i32_1 = arith.constant 0 : i32
    return %c0_i32, %c0_i32_0 : i32, i32
  }
  func.func @transform_2(%arg0: i32, %arg1: memref<3xi32, #tpu.memory_space<smem>>, %arg2: memref<3xi32, #tpu.memory_space<smem>>, %arg3: memref<3xi32, #tpu.memory_space<smem>>, %arg4: memref<3xi32, #tpu.memory_space<smem>>) -> (i32, i32) {
    %c0_i32 = arith.constant 0 : i32
    %c0_i32_0 = arith.constant 0 : i32
    %c0_i32_1 = arith.constant 0 : i32
    return %c0_i32, %c0_i32_0 : i32, i32
  }
  func.func @transform_3(%arg0: i32, %arg1: memref<3xi32, #tpu.memory_space<smem>>, %arg2: memref<3xi32, #tpu.memory_space<smem>>, %arg3: memref<3xi32, #tpu.memory_space<smem>>, %arg4: memref<3xi32, #tpu.memory_space<smem>>) -> (i32, i32) {
    %c0_i32 = arith.constant 0 : i32
    %c0_i32_0 = arith.constant 0 : i32
    %c0_i32_1 = arith.constant 0 : i32
    return %c0_i32, %c0_i32_0 : i32, i32
  }
  func.func @transform_4(%arg0: i32, %arg1: memref<3xi32, #tpu.memory_space<smem>>, %arg2: memref<3xi32, #tpu.memory_space<smem>>, %arg3: memref<3xi32, #tpu.memory_space<smem>>, %arg4: memref<3xi32, #tpu.memory_space<smem>>) -> (i32, i32) {
    %c0_i32 = arith.constant 0 : i32
    %c0_i32_0 = arith.constant 0 : i32
    %c0_i32_1 = arith.constant 0 : i32
    return %c0_i32, %c0_i32_0 : i32, i32
  }
  func.func @transform_5(%arg0: i32, %arg1: memref<3xi32, #tpu.memory_space<smem>>, %arg2: memref<3xi32, #tpu.memory_space<smem>>, %arg3: memref<3xi32, #tpu.memory_space<smem>>, %arg4: memref<3xi32, #tpu.memory_space<smem>>) -> (i32, i32) {
    %c0_i32 = arith.constant 0 : i32
    %c0_i32_0 = arith.constant 0 : i32
    %c0_i32_1 = arith.constant 0 : i32
    return %c0_i32, %c0_i32_0 : i32, i32
  }
  func.func @transform_6(%arg0: i32, %arg1: memref<3xi32, #tpu.memory_space<smem>>, %arg2: memref<3xi32, #tpu.memory_space<smem>>, %arg3: memref<3xi32, #tpu.memory_space<smem>>, %arg4: memref<3xi32, #tpu.memory_space<smem>>) -> (i32, i32) {
    %c0_i32 = arith.constant 0 : i32
    %c0_i32_0 = arith.constant 0 : i32
    %c0_i32_1 = arith.constant 0 : i32
    return %c0_i32, %c0_i32_0 : i32, i32
  }
  func.func @transform_7(%arg0: i32, %arg1: memref<3xi32, #tpu.memory_space<smem>>, %arg2: memref<3xi32, #tpu.memory_space<smem>>, %arg3: memref<3xi32, #tpu.memory_space<smem>>, %arg4: memref<3xi32, #tpu.memory_space<smem>>) -> (i32, i32) {
    %0 = arith.index_cast %arg0 : i32 to index
    %1 = memref.load %arg1[%0] : memref<3xi32, #tpu.memory_space<smem>>
    %c0_i32 = arith.constant 0 : i32
    %c0_i32_0 = arith.constant 0 : i32
    return %1, %c0_i32 : i32, i32
  }
}

module attributes {stable_mosaic.version = 11 : i64} {
  func.func @gml_kernel(%arg0: i32, %arg1: memref<3xi32, #tpu.memory_space<smem>>, %arg2: memref<3xi32, #tpu.memory_space<smem>>, %arg3: memref<3xi32, #tpu.memory_space<smem>>, %arg4: memref<3xi32, #tpu.memory_space<smem>>, %arg5: memref<8x128xf32, #tpu.memory_space<vmem>>, %arg6: memref<128x128xf32, #tpu.memory_space<vmem>>, %arg7: memref<1x128xf32, #tpu.memory_space<vmem>>, %arg8: memref<1x128xf32, #tpu.memory_space<vmem>>, %arg9: memref<128x128xf32, #tpu.memory_space<vmem>>, %arg10: memref<128x128xf32, #tpu.memory_space<vmem>>, %arg11: memref<1x128xf32, #tpu.memory_space<vmem>>, %arg12: memref<8x128xf32, #tpu.memory_space<vmem>>, %arg13: memref<1x1xf32, #tpu.memory_space<vmem>>, %arg14: memref<1x1xf32, #tpu.memory_space<vmem>>, %arg15: memref<1x128xf32, #tpu.memory_space<vmem>>) attributes {dimension_semantics = [#tpu.dimension_semantics<arbitrary>], iteration_bounds = array<i64: 3>, scalar_prefetch = 4 : i64, scratch_operands = 3 : i64, tpu.core_type = #tpu.core_type<tc>, window_params = [{transform_indices = @transform_0, window_bounds = array<i64: 8, 128>}, {pipeline_mode = #tpu.pipeline_mode<synchronous>, transform_indices = @transform_1, window_bounds = array<i64: 128, 128>}, {pipeline_mode = #tpu.pipeline_mode<synchronous>, transform_indices = @transform_2, window_bounds = array<i64: 1, 128>}, {pipeline_mode = #tpu.pipeline_mode<synchronous>, transform_indices = @transform_3, window_bounds = array<i64: 1, 128>}, {pipeline_mode = #tpu.pipeline_mode<synchronous>, transform_indices = @transform_4, window_bounds = array<i64: 128, 128>}, {pipeline_mode = #tpu.pipeline_mode<synchronous>, transform_indices = @transform_5, window_bounds = array<i64: 128, 128>}, {pipeline_mode = #tpu.pipeline_mode<synchronous>, transform_indices = @transform_6, window_bounds = array<i64: 1, 128>}, {transform_indices = @transform_7, window_bounds = array<i64: 8, 128>}]} {
    %0 = arith.index_cast %arg0 : i32 to index
    %1 = memref.load %arg2[%0] : memref<3xi32, #tpu.memory_space<smem>>
    %2 = arith.index_cast %arg0 : i32 to index
    %3 = memref.load %arg3[%2] : memref<3xi32, #tpu.memory_space<smem>>
    %c1_i32 = arith.constant 1 : i32
    %4 = arith.cmpi eq, %3, %c1_i32 : i32
    %5 = arith.extui %4 : i1 to i32
    %c0_i32 = arith.constant 0 : i32
    %6 = arith.cmpi ne, %5, %c0_i32 : i32
    scf.if %6 {
      %cst_35 = arith.constant -1.000000e+30 : f32
      %63 = vector.broadcast %cst_35 : f32 to vector<1x1xf32>
      %c0_36 = arith.constant 0 : index
      %c0_37 = arith.constant 0 : index
      %64 = vector.load %arg13[%c0_36, %c0_37] : memref<1x1xf32, #tpu.memory_space<vmem>>, vector<1x1xf32>
      tpu.vector_store %arg13[%c0_36, %c0_37], %63 {strides = array<i32>} : memref<1x1xf32, #tpu.memory_space<vmem>>, vector<1x1xf32>,
      %cst_38 = arith.constant 0.000000e+00 : f32
      %65 = vector.broadcast %cst_38 : f32 to vector<1x1xf32>
      %c0_39 = arith.constant 0 : index
      %c0_40 = arith.constant 0 : index
      %66 = vector.load %arg14[%c0_39, %c0_40] : memref<1x1xf32, #tpu.memory_space<vmem>>, vector<1x1xf32>
      tpu.vector_store %arg14[%c0_39, %c0_40], %65 {strides = array<i32>} : memref<1x1xf32, #tpu.memory_space<vmem>>, vector<1x1xf32>,
      %cst_41 = arith.constant 0.000000e+00 : f32
      %67 = vector.broadcast %cst_41 : f32 to vector<1x128xf32>
      %c0_42 = arith.constant 0 : index
      %c0_43 = arith.constant 0 : index
      %68 = vector.load %arg15[%c0_42, %c0_43] : memref<1x128xf32, #tpu.memory_space<vmem>>, vector<1x128xf32>
      tpu.vector_store %arg15[%c0_42, %c0_43], %67 {strides = array<i32>} : memref<1x128xf32, #tpu.memory_space<vmem>>, vector<1x128xf32>,
    } else {
    }
    %7 = tpu.iota {dimensions = array<i32: 0>} : vector<8x1xi32>
    %8 = vector.broadcast %1 : i32 to vector<8x1xi32>
    %9 = arith.cmpi slt, %7, %8 : vector<8x1xi32>
    %c0 = arith.constant 0 : index
    %c0_0 = arith.constant 0 : index
    %10 = vector.load %arg5[%c0, %c0_0] : memref<8x128xf32, #tpu.memory_space<vmem>>, vector<8x128xf32>
    %c0_1 = arith.constant 0 : index
    %c0_2 = arith.constant 0 : index
    %11 = vector.load %arg6[%c0_1, %c0_2] : memref<128x128xf32, #tpu.memory_space<vmem>>, vector<128x128xf32>
    %cst = arith.constant dense<0.000000e+00> : vector<8x128xf32>
    %12 = tpu.matmul %10, %11, %cst {dimension_numbers = #tpu.dot_dimension_numbers<[1], [0], [0], [1], [0, 0, 1, 1], [], []>} : vector<8x128xf32>, vector<128x128xf32>, vector<8x128xf32> -> vector<8x128xf32>
    %c0_3 = arith.constant 0 : index
    %c0_4 = arith.constant 0 : index
    %13 = vector.load %arg7[%c0_3, %c0_4] : memref<1x128xf32, #tpu.memory_space<vmem>>, vector<1x128xf32>
    %14 = vector.broadcast %13 : vector<1x128xf32> to vector<8x128xf32>
    %15 = arith.subf %12, %14 : vector<8x128xf32>
    %16 = arith.mulf %15, %15 : vector<8x128xf32>
    %c0_5 = arith.constant 0 : index
    %c0_6 = arith.constant 0 : index
    %17 = vector.load %arg8[%c0_5, %c0_6] : memref<1x128xf32, #tpu.memory_space<vmem>>, vector<1x128xf32>
    %18 = vector.broadcast %17 : vector<1x128xf32> to vector<8x128xf32>
    %19 = arith.mulf %16, %18 : vector<8x128xf32>
    %20 = math.exp %19 : vector<8x128xf32>
    %21 = arith.mulf %12, %20 : vector<8x128xf32>
    %c0_7 = arith.constant 0 : index
    %c0_8 = arith.constant 0 : index
    %22 = vector.load %arg9[%c0_7, %c0_8] : memref<128x128xf32, #tpu.memory_space<vmem>>, vector<128x128xf32>
    %cst_9 = arith.constant dense<0.000000e+00> : vector<8x128xf32>
    %23 = tpu.matmul %21, %22, %cst_9 {dimension_numbers = #tpu.dot_dimension_numbers<[1], [0], [0], [1], [0, 0, 1, 1], [], []>} : vector<8x128xf32>, vector<128x128xf32>, vector<8x128xf32> -> vector<8x128xf32>
    %c0_10 = arith.constant 0 : index
    %c0_11 = arith.constant 0 : index
    %24 = vector.load %arg10[%c0_10, %c0_11] : memref<128x128xf32, #tpu.memory_space<vmem>>, vector<128x128xf32>
    %cst_12 = arith.constant dense<0.000000e+00> : vector<8x128xf32>
    %25 = tpu.matmul %23, %24, %cst_12 {dimension_numbers = #tpu.dot_dimension_numbers<[1], [0], [0], [1], [0, 0, 1, 1], [], []>} : vector<8x128xf32>, vector<128x128xf32>, vector<8x128xf32> -> vector<8x128xf32>
    %26 = math.tanh %25 : vector<8x128xf32>
    %c0_13 = arith.constant 0 : index
    %c0_14 = arith.constant 0 : index
    %27 = vector.load %arg11[%c0_13, %c0_14] : memref<1x128xf32, #tpu.memory_space<vmem>>, vector<1x128xf32>
    %28 = vector.broadcast %27 : vector<1x128xf32> to vector<8x128xf32>
    %29 = arith.mulf %26, %28 : vector<8x128xf32>
    %cst_15 = arith.constant dense<0.000000e+00> : vector<8xf32>
    %30 = vector.multi_reduction <add>, %29, %cst_15 [1] : vector<8x128xf32> to vector<8xf32>
    %31 = vector.shape_cast %30 : vector<8xf32> to vector<8x1xf32>
    %cst_16 = arith.constant -1.000000e+30 : f32
    %32 = vector.broadcast %cst_16 : f32 to vector<8x1xf32>
    %33 = arith.select %9, %31, %32 : vector<8x1xi1>, vector<8x1xf32>
    %c0_17 = arith.constant 0 : index
    %c0_18 = arith.constant 0 : index
    %34 = vector.load %arg13[%c0_17, %c0_18] : memref<1x1xf32, #tpu.memory_space<vmem>>, vector<1x1xf32>
    %cst_19 = arith.constant dense<0xFF800000> : vector<1xf32>
    %35 = vector.multi_reduction <maximumf>, %33, %cst_19 [0] : vector<8x1xf32> to vector<1xf32>
    %36 = vector.shape_cast %35 : vector<1xf32> to vector<1x1xf32>
    %37 = arith.maximumf %34, %36 : vector<1x1xf32>
    %38 = arith.subf %34, %37 : vector<1x1xf32>
    %39 = math.exp %38 : vector<1x1xf32>
    %40 = vector.broadcast %37 : vector<1x1xf32> to vector<8x1xf32>
    %41 = arith.subf %33, %40 : vector<8x1xf32>
    %42 = math.exp %41 : vector<8x1xf32>
    %cst_20 = arith.constant 0.000000e+00 : f32
    %43 = vector.broadcast %cst_20 : f32 to vector<8x1xf32>
    %44 = arith.select %9, %42, %43 : vector<8x1xi1>, vector<8x1xf32>
    %c0_21 = arith.constant 0 : index
    %c0_22 = arith.constant 0 : index
    %45 = vector.load %arg14[%c0_21, %c0_22] : memref<1x1xf32, #tpu.memory_space<vmem>>, vector<1x1xf32>
    %46 = arith.mulf %39, %45 : vector<1x1xf32>
    %cst_23 = arith.constant dense<0.000000e+00> : vector<1xf32>
    %47 = vector.multi_reduction <add>, %44, %cst_23 [0] : vector<8x1xf32> to vector<1xf32>
    %48 = vector.shape_cast %47 : vector<1xf32> to vector<1x1xf32>
    %49 = arith.addf %46, %48 : vector<1x1xf32>
    %c0_24 = arith.constant 0 : index
    %c0_25 = arith.constant 0 : index
    %50 = vector.load %arg14[%c0_24, %c0_25] : memref<1x1xf32, #tpu.memory_space<vmem>>, vector<1x1xf32>
    tpu.vector_store %arg14[%c0_24, %c0_25], %49 {strides = array<i32>} : memref<1x1xf32, #tpu.memory_space<vmem>>, vector<1x1xf32>,
    %c0_26 = arith.constant 0 : index
    %c0_27 = arith.constant 0 : index
    %51 = vector.load %arg15[%c0_26, %c0_27] : memref<1x128xf32, #tpu.memory_space<vmem>>, vector<1x128xf32>
    %52 = vector.broadcast %39 : vector<1x1xf32> to vector<1x128xf32>
    %53 = arith.mulf %52, %51 : vector<1x128xf32>
    %cst_28 = arith.constant dense<0.000000e+00> : vector<1x128xf32>
    %54 = tpu.matmul %44, %23, %cst_28 {dimension_numbers = #tpu.dot_dimension_numbers<[0], [0], [1], [1], [0, 1, 1, 1], [], []>} : vector<8x1xf32>, vector<8x128xf32>, vector<1x128xf32> -> vector<1x128xf32>
    %55 = arith.addf %53, %54 : vector<1x128xf32>
    %c0_29 = arith.constant 0 : index
    %c0_30 = arith.constant 0 : index
    %56 = vector.load %arg15[%c0_29, %c0_30] : memref<1x128xf32, #tpu.memory_space<vmem>>, vector<1x128xf32>
    tpu.vector_store %arg15[%c0_29, %c0_30], %55 {strides = array<i32>} : memref<1x128xf32, #tpu.memory_space<vmem>>, vector<1x128xf32>,
    %c0_31 = arith.constant 0 : index
    %c0_32 = arith.constant 0 : index
    %57 = vector.load %arg13[%c0_31, %c0_32] : memref<1x1xf32, #tpu.memory_space<vmem>>, vector<1x1xf32>
    tpu.vector_store %arg13[%c0_31, %c0_32], %37 {strides = array<i32>} : memref<1x1xf32, #tpu.memory_space<vmem>>, vector<1x1xf32>,
    %58 = arith.index_cast %arg0 : i32 to index
    %59 = memref.load %arg4[%58] : memref<3xi32, #tpu.memory_space<smem>>
    %c1_i32_33 = arith.constant 1 : i32
    %60 = arith.cmpi eq, %59, %c1_i32_33 : i32
    %61 = arith.extui %60 : i1 to i32
    %c0_i32_34 = arith.constant 0 : i32
    %62 = arith.cmpi ne, %61, %c0_i32_34 : i32
    scf.if %62 {
      %c0_35 = arith.constant 0 : index
      %c0_36 = arith.constant 0 : index
      %63 = vector.load %arg15[%c0_35, %c0_36] : memref<1x128xf32, #tpu.memory_space<vmem>>, vector<1x128xf32>
      %c0_37 = arith.constant 0 : index
      %c0_38 = arith.constant 0 : index
      %64 = vector.load %arg14[%c0_37, %c0_38] : memref<1x1xf32, #tpu.memory_space<vmem>>, vector<1x1xf32>
      %cst_39 = arith.constant 1.000000e-16 : f32
      %65 = vector.broadcast %cst_39 : f32 to vector<1x1xf32>
      %66 = arith.addf %64, %65 : vector<1x1xf32>
      %cst_40 = arith.constant 1.000000e+00 : f32
      %67 = vector.broadcast %cst_40 : f32 to vector<1x1xf32>
      %68 = arith.divf %67, %66 : vector<1x1xf32>
      %69 = vector.broadcast %68 : vector<1x1xf32> to vector<1x128xf32>
      %70 = arith.mulf %63, %69 : vector<1x128xf32>
      %71 = vector.shape_cast %70 : vector<1x128xf32> to vector<1x128xf32>
      %72 = vector.broadcast %71 : vector<1x128xf32> to vector<8x128xf32>
      %c0_41 = arith.constant 0 : index
      %c0_42 = arith.constant 0 : index
      %73 = vector.load %arg12[%c0_41, %c0_42] : memref<8x128xf32, #tpu.memory_space<vmem>>, vector<8x128xf32>
      tpu.vector_store %arg12[%c0_41, %c0_42], %72 {strides = array<i32>} : memref<8x128xf32, #tpu.memory_space<vmem>>, vector<8x128xf32>,
    } else {
    }
    return
  }
  func.func @transform_0(%arg0: i32, %arg1: memref<3xi32, #tpu.memory_space<smem>>, %arg2: memref<3xi32, #tpu.memory_space<smem>>, %arg3: memref<3xi32, #tpu.memory_space<smem>>, %arg4: memref<3xi32, #tpu.memory_space<smem>>) -> (i32, i32) {
    %c0_i32 = arith.constant 0 : i32
    %c0_i32_0 = arith.constant 0 : i32
    return %arg0, %c0_i32 : i32, i32
  }
  func.func @transform_1(%arg0: i32, %arg1: memref<3xi32, #tpu.memory_space<smem>>, %arg2: memref<3xi32, #tpu.memory_space<smem>>, %arg3: memref<3xi32, #tpu.memory_space<smem>>, %arg4: memref<3xi32, #tpu.memory_space<smem>>) -> (i32, i32) {
    %c0_i32 = arith.constant 0 : i32
    %c0_i32_0 = arith.constant 0 : i32
    %c0_i32_1 = arith.constant 0 : i32
    return %c0_i32, %c0_i32_0 : i32, i32
  }
  func.func @transform_2(%arg0: i32, %arg1: memref<3xi32, #tpu.memory_space<smem>>, %arg2: memref<3xi32, #tpu.memory_space<smem>>, %arg3: memref<3xi32, #tpu.memory_space<smem>>, %arg4: memref<3xi32, #tpu.memory_space<smem>>) -> (i32, i32) {
    %c0_i32 = arith.constant 0 : i32
    %c0_i32_0 = arith.constant 0 : i32
    %c0_i32_1 = arith.constant 0 : i32
    return %c0_i32, %c0_i32_0 : i32, i32
  }
  func.func @transform_3(%arg0: i32, %arg1: memref<3xi32, #tpu.memory_space<smem>>, %arg2: memref<3xi32, #tpu.memory_space<smem>>, %arg3: memref<3xi32, #tpu.memory_space<smem>>, %arg4: memref<3xi32, #tpu.memory_space<smem>>) -> (i32, i32) {
    %c0_i32 = arith.constant 0 : i32
    %c0_i32_0 = arith.constant 0 : i32
    %c0_i32_1 = arith.constant 0 : i32
    return %c0_i32, %c0_i32_0 : i32, i32
  }
  func.func @transform_4(%arg0: i32, %arg1: memref<3xi32, #tpu.memory_space<smem>>, %arg2: memref<3xi32, #tpu.memory_space<smem>>, %arg3: memref<3xi32, #tpu.memory_space<smem>>, %arg4: memref<3xi32, #tpu.memory_space<smem>>) -> (i32, i32) {
    %c0_i32 = arith.constant 0 : i32
    %c0_i32_0 = arith.constant 0 : i32
    %c0_i32_1 = arith.constant 0 : i32
    return %c0_i32, %c0_i32_0 : i32, i32
  }
  func.func @transform_5(%arg0: i32, %arg1: memref<3xi32, #tpu.memory_space<smem>>, %arg2: memref<3xi32, #tpu.memory_space<smem>>, %arg3: memref<3xi32, #tpu.memory_space<smem>>, %arg4: memref<3xi32, #tpu.memory_space<smem>>) -> (i32, i32) {
    %c0_i32 = arith.constant 0 : i32
    %c0_i32_0 = arith.constant 0 : i32
    %c0_i32_1 = arith.constant 0 : i32
    return %c0_i32, %c0_i32_0 : i32, i32
  }
  func.func @transform_6(%arg0: i32, %arg1: memref<3xi32, #tpu.memory_space<smem>>, %arg2: memref<3xi32, #tpu.memory_space<smem>>, %arg3: memref<3xi32, #tpu.memory_space<smem>>, %arg4: memref<3xi32, #tpu.memory_space<smem>>) -> (i32, i32) {
    %c0_i32 = arith.constant 0 : i32
    %c0_i32_0 = arith.constant 0 : i32
    %c0_i32_1 = arith.constant 0 : i32
    return %c0_i32, %c0_i32_0 : i32, i32
  }
  func.func @transform_7(%arg0: i32, %arg1: memref<3xi32, #tpu.memory_space<smem>>, %arg2: memref<3xi32, #tpu.memory_space<smem>>, %arg3: memref<3xi32, #tpu.memory_space<smem>>, %arg4: memref<3xi32, #tpu.memory_space<smem>>) -> (i32, i32) {
    %0 = arith.index_cast %arg0 : i32 to index
    %1 = memref.load %arg1[%0] : memref<3xi32, #tpu.memory_space<smem>>
    %c0_i32 = arith.constant 0 : i32
    %c0_i32_0 = arith.constant 0 : i32
    return %1, %c0_i32 : i32, i32
  }
}

</mosaic_0001>

<llo_original>
// kernel: tpu_custom_call.1
$region0: #{tpu_custom_call.1}
  #allocation0 [shape = 'u32[]', space=smem, size = 0x4, offset = 0x4, fixed_abs, tag = 'smem constant byte address 0x4 - core index']
  #allocation1 [shape = 'u32[144,128]{1,0:T(1,128)}', space=vmem, size = 0x12000, scoped, tag = 'internal scratch']
  #allocation2 [shape = 'f32[1,1]{1,0:T(1,128)}', space=vmem, size = 0x200, scoped, tag = 'scratch operand']
  #allocation3 [shape = 'f32[1,1]{1,0:T(1,128)}', space=vmem, size = 0x200, scoped, tag = 'scratch operand']
  #allocation4 [shape = 'f32[1,128]{1,0:T(1,128)}', space=vmem, size = 0x200, scoped, tag = 'scratch operand']
  #allocation5 [shape = 's32[1]{0}', space=sflag, size = 0x4, scoped, tag = 'scoped memory for tpu_custom_call.1']
  #allocation6 [shape = 'u8[512]{0}', space=smem, size = 0x200, scoped, tag = 'prefetched SMEM operand 0']
  #allocation7 [shape = 'u8[512]{0}', space=smem, size = 0x200, scoped, tag = 'prefetched SMEM operand 1']
  #allocation8 [shape = 'u8[512]{0}', space=smem, size = 0x200, scoped, tag = 'prefetched SMEM operand 2']
  #allocation9 [shape = 'u8[512]{0}', space=smem, size = 0x200, scoped, tag = 'prefetched SMEM operand 3']
  %s0 = inlined_call_operand.hbm [shape: s32[3], index: 0, kind: input, shape index: {}]
  %s1 = inlined_call_operand.hbm [shape: s32[3], index: 1, kind: input, shape index: {}]
  %s2 = inlined_call_operand.hbm [shape: s32[3], index: 2, kind: input, shape index: {}]
  %s3 = inlined_call_operand.hbm [shape: s32[3], index: 3, kind: input, shape index: {}]
  %s4 = inlined_call_operand.hbm [shape: f32[24,128], index: 4, kind: input, shape index: {}]
  %s5 = inlined_call_operand.hbm [shape: f32[128,128], index: 5, kind: input, shape index: {}]
  %s6 = inlined_call_operand.hbm [shape: f32[1,128], index: 6, kind: input, shape index: {}]
  %s7 = inlined_call_operand.hbm [shape: f32[1,128], index: 7, kind: input, shape index: {}]
  %s8 = inlined_call_operand.hbm [shape: f32[128,128], index: 8, kind: input, shape index: {}]
  %s9 = inlined_call_operand.hbm [shape: f32[128,128], index: 9, kind: input, shape index: {}]
  %s10 = inlined_call_operand.hbm [shape: f32[1,128], index: 10, kind: input, shape index: {}]
  %s11 = inlined_call_operand.hbm [shape: f32[16,128], index: 11, kind: output, shape index: {}]
  %s12 = sld [smem:[#allocation0]]
  $region97: #{tpu_custom_call.1} parent=0
    _
  %s14 = ssub.s32 1, %s12
  %s15 = scalar_select 0, %s14, %s12
  %17 = dma.hbm_to_smem %s0, 16, [#allocation6], [#allocation5]
  %19 = dma.hbm_to_smem %s1, 16, [#allocation7], [#allocation5]
  %21 = dma.hbm_to_smem %s2, 16, [#allocation8], [#allocation5]
  %23 = dma.hbm_to_smem %s3, 16, [#allocation9], [#allocation5]
  %24 = dma.done [#allocation5], 64
  %25 = sfence
  $region1: #{tpu_custom_call.1} parent=0
    #allocation10 [shape = 'u8[8192]{0}', space=vmem, size = 0x2000, scoped, tag = 'input window, operand 4']
    #allocation11 [shape = 's32[2]{0}', space=sflag, size = 0x8, scoped, tag = 'scoped memory for tpu_custom_call.1']
    #allocation12 [shape = 's32[2]{0}', space=sflag, size = 0x8, scoped, tag = 'scoped memory for tpu_custom_call.1']
    #allocation13 [shape = 'u8[65536]{0}', space=vmem, size = 0x10000, scoped, tag = 'input window, operand 5, single buffered']
    #allocation14 [shape = 's32[1]{0}', space=sflag, size = 0x4, scoped, tag = 'scoped memory for tpu_custom_call.1']
    #allocation15 [shape = 'u8[512]{0}', space=vmem, size = 0x400, scoped, tag = 'input window, operand 6, single buffered']
    #allocation16 [shape = 'u8[512]{0}', space=vmem, size = 0x400, scoped, tag = 'input window, operand 7, single buffered']
    #allocation17 [shape = 's32[1]{0}', space=sflag, size = 0x4, scoped, tag = 'scoped memory for tpu_custom_call.1']
    #allocation18 [shape = 'u8[65536]{0}', space=vmem, size = 0x10000, scoped, tag = 'input window, operand 8, single buffered']
    #allocation19 [shape = 'u8[65536]{0}', space=vmem, size = 0x10000, scoped, tag = 'input window, operand 9, single buffered']
    #allocation20 [shape = 's32[1]{0}', space=sflag, size = 0x4, scoped, tag = 'scoped memory for tpu_custom_call.1']
    #allocation21 [shape = 'u8[512]{0}', space=vmem, size = 0x400, scoped, tag = 'input window, operand 10, single buffered']
    #allocation22 [shape = 'u8[8192]{0}', space=vmem, size = 0x2000, scoped, tag = 'output window, operand 0']
    %26 = vsyncpa [#allocation11], 0
    %s27 = scalar_lea.sflag [#allocation11], 1
    %28 = vsyncpa %s27, 0
    %29 = vsyncpa [#allocation14], 0
    %30 = vsyncpa [#allocation17], 0
    %31 = vsyncpa [#allocation20], 0
    %32 = vsyncpa [#allocation12], 0
    %s33 = scalar_lea.sflag [#allocation12], 1
    %34 = vsyncpa %s33, 0
    loop: start=0, step=1, limit=5
    $region2: #{tpu_custom_call.1} parent=1 // loop_pre_header
      _
    $region3: #{tpu_custom_call.1} parent=1 // loop_header
      %s36 = sphi 0, %s40
      %p37 = scmp.ge.s32.totalorder %s36, 5
      %s46 = sphi 0, %s48
      %s49 = sphi 0, %s46
      %s50 = sphi 0, %s49
      %s66 = sphi 0, %s50
      %s70 = sphi 0, %s70
      %s72 = sphi 0, %s70
      %s73 = sphi 0, %s72
      %s87 = sphi 0, %s73
      %s91 = sphi 0, %s91
      %s93 = sphi 0, %s91
      %s94 = sphi 0, %s93
      %s108 = sphi 0, %s94
      %s112 = sphi 0, %s112
      %s114 = sphi 0, %s112
      %s115 = sphi 0, %s114
      %s129 = sphi 0, %s115
      %s133 = sphi 0, %s133
      %s135 = sphi 0, %s133
      %s136 = sphi 0, %s135
      %s150 = sphi 0, %s136
      %s154 = sphi 0, %s154
      %s156 = sphi 0, %s154
      %s157 = sphi 0, %s156
      %s171 = sphi 0, %s157
      %s175 = sphi 0, %s175
      %s177 = sphi 0, %s175
      %s178 = sphi 0, %s177
      %s192 = sphi 0, %s178
      %s200 = sphi 0, %s202
      %s203 = sphi 0, %s200
      %s204 = sphi 0, %s203
      %s220 = sphi 0, %s204
    $region4: #{tpu_custom_call.1} parent=1 // loop_header_branch
      %39 = sbr.rel (%p37) target = $region8
    $region5: #{tpu_custom_call.1} parent=1 // loop_body
      %s41 = ssub.s32 %s36, 1
      %s42 = ssub.s32 %s36, 2
      %s43 = sadd.s32 %s36, 1
      %s44 = ssub.s32 %s36, %s43
      %p45 = scmp.eq.s32.totalorder %s44, 0
      %s47 = sadd.s32 %s46, 1
      %s48 = scalar_select %p45, %s46, %s47
      %p51 = pneg %p45
      %p52 = scmp.eq.s32.totalorder %s36, 2
      %p53 = por %p51, %p52
      %p54 = scmp.ne.s32.totalorder %s46, %s49
      %p55 = scmp.eq.s32.totalorder %s36, 0
      %p56 = por %p54, %p55
      %p57 = scmp.ne.s32.totalorder %s46, %s49
      %p58 = scmp.eq.s32.totalorder %s41, 2
      %p59 = por %p57, %p58
      %p60 = scmp.ne.s32.totalorder %s49, %s50
      %p61 = scmp.eq.s32.totalorder %s41, 0
      %p62 = por %p60, %p61
      %p63 = scmp.ne.s32.totalorder %s49, %s50
      %p64 = scmp.eq.s32.totalorder %s42, 2
      %p65 = por %p63, %p64
      %p67 = scmp.ne.s32.totalorder %s50, %s66
      %p68 = scmp.eq.s32.totalorder %s42, 0
      %p69 = por %p67, %p68
      %s71 = sadd.s32 %s70, 1
      %p74 = scmp.eq.s32.totalorder %s36, 2
      %p75 = scmp.ne.s32.totalorder %s70, %s72
      %p76 = scmp.eq.s32.totalorder %s36, 0
      %p77 = por %p75, %p76
      %p78 = scmp.ne.s32.totalorder %s70, %s72
      %p79 = scmp.eq.s32.totalorder %s41, 2
      %p80 = por %p78, %p79
      %p81 = scmp.ne.s32.totalorder %s72, %s73
      %p82 = scmp.eq.s32.totalorder %s41, 0
      %p83 = por %p81, %p82
      %p84 = scmp.ne.s32.totalorder %s72, %s73
      %p85 = scmp.eq.s32.totalorder %s42, 2
      %p86 = por %p84, %p85
      %p88 = scmp.ne.s32.totalorder %s73, %s87
      %p89 = scmp.eq.s32.totalorder %s42, 0
      %p90 = por %p88, %p89
      %s92 = sadd.s32 %s91, 1
      %p95 = scmp.eq.s32.totalorder %s36, 2
      %p96 = scmp.ne.s32.totalorder %s91, %s93
      %p97 = scmp.eq.s32.totalorder %s36, 0
      %p98 = por %p96, %p97
      %p99 = scmp.ne.s32.totalorder %s91, %s93
      %p100 = scmp.eq.s32.totalorder %s41, 2
      %p101 = por %p99, %p100
      %p102 = scmp.ne.s32.totalorder %s93, %s94
      %p103 = scmp.eq.s32.totalorder %s41, 0
      %p104 = por %p102, %p103
      %p105 = scmp.ne.s32.totalorder %s93, %s94
      %p106 = scmp.eq.s32.totalorder %s42, 2
      %p107 = por %p105, %p106
      %p109 = scmp.ne.s32.totalorder %s94, %s108
      %p110 = scmp.eq.s32.totalorder %s42, 0
      %p111 = por %p109, %p110
      %s113 = sadd.s32 %s112, 1
      %p116 = scmp.eq.s32.totalorder %s36, 2
      %p117 = scmp.ne.s32.totalorder %s112, %s114
      %p118 = scmp.eq.s32.totalorder %s36, 0
      %p119 = por %p117, %p118
      %p120 = scmp.ne.s32.totalorder %s112, %s114
      %p121 = scmp.eq.s32.totalorder %s41, 2
      %p122 = por %p120, %p121
      %p123 = scmp.ne.s32.totalorder %s114, %s115
      %p124 = scmp.eq.s32.totalorder %s41, 0
      %p125 = por %p123, %p124
      %p126 = scmp.ne.s32.totalorder %s114, %s115
      %p127 = scmp.eq.s32.totalorder %s42, 2
      %p128 = por %p126, %p127
      %p130 = scmp.ne.s32.totalorder %s115, %s129
      %p131 = scmp.eq.s32.totalorder %s42, 0
      %p132 = por %p130, %p131
      %s134 = sadd.s32 %s133, 1
      %p137 = scmp.eq.s32.totalorder %s36, 2
      %p138 = scmp.ne.s32.totalorder %s133, %s135
      %p139 = scmp.eq.s32.totalorder %s36, 0
      %p140 = por %p138, %p139
      %p141 = scmp.ne.s32.totalorder %s133, %s135
      %p142 = scmp.eq.s32.totalorder %s41, 2
      %p143 = por %p141, %p142
      %p144 = scmp.ne.s32.totalorder %s135, %s136
      %p145 = scmp.eq.s32.totalorder %s41, 0
      %p146 = por %p144, %p145
      %p147 = scmp.ne.s32.totalorder %s135, %s136
      %p148 = scmp.eq.s32.totalorder %s42, 2
      %p149 = por %p147, %p148
      %p151 = scmp.ne.s32.totalorder %s136, %s150
      %p152 = scmp.eq.s32.totalorder %s42, 0
      %p153 = por %p151, %p152
      %s155 = sadd.s32 %s154, 1
      %p158 = scmp.eq.s32.totalorder %s36, 2
      %p159 = scmp.ne.s32.totalorder %s154, %s156
      %p160 = scmp.eq.s32.totalorder %s36, 0
      %p161 = por %p159, %p160
      %p162 = scmp.ne.s32.totalorder %s154, %s156
      %p163 = scmp.eq.s32.totalorder %s41, 2
      %p164 = por %p162, %p163
      %p165 = scmp.ne.s32.totalorder %s156, %s157
      %p166 = scmp.eq.s32.totalorder %s41, 0
      %p167 = por %p165, %p166
      %p168 = scmp.ne.s32.totalorder %s156, %s157
      %p169 = scmp.eq.s32.totalorder %s42, 2
      %p170 = por %p168, %p169
      %p172 = scmp.ne.s32.totalorder %s157, %s171
      %p173 = scmp.eq.s32.totalorder %s42, 0
      %p174 = por %p172, %p173
      %s176 = sadd.s32 %s175, 1
      %p179 = scmp.eq.s32.totalorder %s36, 2
      %p180 = scmp.ne.s32.totalorder %s175, %s177
      %p181 = scmp.eq.s32.totalorder %s36, 0
      %p182 = por %p180, %p181
      %p183 = scmp.ne.s32.totalorder %s175, %s177
      %p184 = scmp.eq.s32.totalorder %s41, 2
      %p185 = por %p183, %p184
      %p186 = scmp.ne.s32.totalorder %s177, %s178
      %p187 = scmp.eq.s32.totalorder %s41, 0
      %p188 = por %p186, %p187
      %p189 = scmp.ne.s32.totalorder %s177, %s178
      %p190 = scmp.eq.s32.totalorder %s42, 2
      %p191 = por %p189, %p190
      %p193 = scmp.ne.s32.totalorder %s178, %s192
      %p194 = scmp.eq.s32.totalorder %s42, 0
      %p195 = por %p193, %p194
      %s196 = sld [smem:[#allocation6 + %s36]]
      %s197 = sld [smem:[#allocation6 + %s43]]
      %s198 = ssub.s32 %s196, %s197
      %p199 = scmp.eq.s32.totalorder %s198, 0
      %s201 = sadd.s32 %s200, 1
      %s202 = scalar_select %p199, %s200, %s201
      %p205 = pneg %p199
      %p206 = scmp.eq.s32.totalorder %s36, 2
      %p207 = por %p205, %p206
      %p208 = scmp.ne.s32.totalorder %s200, %s203
      %p209 = scmp.eq.s32.totalorder %s36, 0
      %p210 = por %p208, %p209
      %p211 = scmp.ne.s32.totalorder %s200, %s203
      %p212 = scmp.eq.s32.totalorder %s41, 2
      %p213 = por %p211, %p212
      %p214 = scmp.ne.s32.totalorder %s203, %s204
      %p215 = scmp.eq.s32.totalorder %s41, 0
      %p216 = por %p214, %p215
      %p217 = scmp.ne.s32.totalorder %s203, %s204
      %p218 = scmp.eq.s32.totalorder %s42, 2
      %p219 = por %p217, %p218
      %p221 = scmp.ne.s32.totalorder %s204, %s220
      %p222 = scmp.eq.s32.totalorder %s42, 0
      %p223 = por %p221, %p222
      %p224 = scmp.le.s32.totalorder 1, %s36
      %p225 = scmp.lt.s32.totalorder %s36, 4
      %p226 = pnand %p224, %p225
      %p227 = pneg %p226
      // Predicated region
      $region9: #{tpu_custom_call.1} parent=5 // pred_check
        _
      $region10: #{tpu_custom_call.1} parent=5 // pred_check_branch
        %229 = sbr.rel (%p226) target = $region12
      $region11: #{tpu_custom_call.1} parent=5 // pred_region
        %s230 = ssub.s32 %s36, 1
        // Predicated region
        $region13: #{tpu_custom_call.1} parent=11 // pred_check
          %p231 = pneg %p83
        $region14: #{tpu_custom_call.1} parent=11 // pred_check_branch
          %233 = sbr.rel (%p231) target = $region16
        $region15: #{tpu_custom_call.1} parent=11 // pred_region
          %s235 = ssub.s32 2048, 2048
          %236 = vsyncadd [#allocation14], %s235
          %s237 = sshll.u32 [#allocation13], 4
          %s238 = int_to_ptr.vmem [resolvable:$true] %s237
          %243 = dma.hbm_to_vmem [thread:$0]  %s5, 2048, %s238, [#allocation14], 128, 128, 8
        $region16: #{tpu_custom_call.1} parent=11 // pred_fallthru
          _
        // Predicated region
        $region17: #{tpu_custom_call.1} parent=11 // pred_check
          %p244 = pneg %p104
        $region18: #{tpu_custom_call.1} parent=11 // pred_check_branch
          %246 = sbr.rel (%p244) target = $region20
        $region19: #{tpu_custom_call.1} parent=11 // pred_region
          %s248 = ssub.s32 16, 16
          %249 = vsyncadd [#allocation14], %s248
          %s251 = sshll.u32 [#allocation15], 4
          %s252 = int_to_ptr.vmem [resolvable:$true] %s251
          %254 = dma.hbm_to_vmem [thread:$0]  %s6, 16, %s252, [#allocation14]
        $region20: #{tpu_custom_call.1} parent=11 // pred_fallthru
          _
        // Predicated region
        $region21: #{tpu_custom_call.1} parent=11 // pred_check
          %p255 = pneg %p125
        $region22: #{tpu_custom_call.1} parent=11 // pred_check_branch
          %257 = sbr.rel (%p255) target = $region24
        $region23: #{tpu_custom_call.1} parent=11 // pred_region
          %s259 = ssub.s32 16, 16
          %260 = vsyncadd [#allocation17], %s259
          %s262 = sshll.u32 [#allocation16], 4
          %s263 = int_to_ptr.vmem [resolvable:$true] %s262
          %265 = dma.hbm_to_vmem [thread:$0]  %s7, 16, %s263, [#allocation17]
        $region24: #{tpu_custom_call.1} parent=11 // pred_fallthru
          _
        // Predicated region
        $region25: #{tpu_custom_call.1} parent=11 // pred_check
          %p266 = pneg %p146
        $region26: #{tpu_custom_call.1} parent=11 // pred_check_branch
          %268 = sbr.rel (%p266) target = $region28
        $region27: #{tpu_custom_call.1} parent=11 // pred_region
          %s270 = ssub.s32 2048, 2048
          %271 = vsyncadd [#allocation17], %s270
          %s272 = sshll.u32 [#allocation18], 4
          %s273 = int_to_ptr.vmem [resolvable:$true] %s272
          %278 = dma.hbm_to_vmem [thread:$0]  %s8, 2048, %s273, [#allocation17], 128, 128, 8
        $region28: #{tpu_custom_call.1} parent=11 // pred_fallthru
          _
        // Predicated region
        $region29: #{tpu_custom_call.1} parent=11 // pred_check
          %p279 = pneg %p167
        $region30: #{tpu_custom_call.1} parent=11 // pred_check_branch
          %281 = sbr.rel (%p279) target = $region32
        $region31: #{tpu_custom_call.1} parent=11 // pred_region
          %s283 = ssub.s32 2048, 2048
          %284 = vsyncadd [#allocation20], %s283
          %s285 = sshll.u32 [#allocation19], 4
          %s286 = int_to_ptr.vmem [resolvable:$true] %s285
          %291 = dma.hbm_to_vmem [thread:$0]  %s9, 2048, %s286, [#allocation20], 128, 128, 8
        $region32: #{tpu_custom_call.1} parent=11 // pred_fallthru
          _
        // Predicated region
        $region33: #{tpu_custom_call.1} parent=11 // pred_check
          %p292 = pneg %p188
        $region34: #{tpu_custom_call.1} parent=11 // pred_check_branch
          %294 = sbr.rel (%p292) target = $region36
        $region35: #{tpu_custom_call.1} parent=11 // pred_region
          %s296 = ssub.s32 16, 16
          %297 = vsyncadd [#allocation20], %s296
          %s299 = sshll.u32 [#allocation21], 4
          %s300 = int_to_ptr.vmem [resolvable:$true] %s299
          %302 = dma.hbm_to_vmem [thread:$0]  %s10, 16, %s300, [#allocation20]
        $region36: #{tpu_custom_call.1} parent=11 // pred_fallthru
          _
      $region12: #{tpu_custom_call.1} parent=5 // pred_fallthru
        _
      %p303 = scmp.lt.s32.totalorder %s36, 3
      // Predicated region
      $region37: #{tpu_custom_call.1} parent=5 // pred_check
        %p304 = pneg %p303
      $region38: #{tpu_custom_call.1} parent=5 // pred_check_branch
        %306 = sbr.rel (%p304) target = $region40
      $region39: #{tpu_custom_call.1} parent=5 // pred_region
        // Predicated region
        $region41: #{tpu_custom_call.1} parent=39 // pred_check
          %p307 = pneg %p56
        $region42: #{tpu_custom_call.1} parent=39 // pred_check_branch
          %309 = sbr.rel (%p307) target = $region44
        $region43: #{tpu_custom_call.1} parent=39 // pred_region
          %s310 = sand.u32 %s46, 1
          %s311 = scalar_lea.sflag [#allocation11], %s310
          %s312 = sand.u32 %s46, 1
          %s313 = smul.addr %s312, 8
          %s314 = scalar_lea.vmem [#allocation10], %s313
          %s316 = ssub.s32 128, 128
          %317 = vsyncadd %s311, %s316
          %s318 = smul.addr %s36, 128
          %s319 = scalar_lea.hbm %s4, %s318
          %s321 = sshll.u32 %s314, 4
          %s322 = int_to_ptr.vmem [resolvable:$true] %s321
          %324 = dma.hbm_to_vmem [thread:$0]  %s319, 128, %s322, %s311
        $region44: #{tpu_custom_call.1} parent=39 // pred_fallthru
          _
      $region40: #{tpu_custom_call.1} parent=5 // pred_fallthru
        _
      %p325 = scmp.le.s32.totalorder 1, %s36
      %p326 = scmp.lt.s32.totalorder %s36, 4
      %p327 = pnand %p325, %p326
      %p328 = pneg %p327
      // Predicated region
      $region45: #{tpu_custom_call.1} parent=5 // pred_check
        _
      $region46: #{tpu_custom_call.1} parent=5 // pred_check_branch
        %330 = sbr.rel (%p327) target = $region48
      $region47: #{tpu_custom_call.1} parent=5 // pred_region
        %s331 = ssub.s32 %s36, 1
        %s332 = sand.u32 %s49, 1
        %s333 = scalar_lea.sflag [#allocation11], %s332
        %s334 = sand.u32 %s49, 1
        %s335 = smul.addr %s334, 8
        %s336 = scalar_lea.vmem [#allocation10], %s335
        // Predicated region
        $region49: #{tpu_custom_call.1} parent=47 // pred_check
          %p337 = pneg %p62
        $region50: #{tpu_custom_call.1} parent=47 // pred_check_branch
          %339 = sbr.rel (%p337) target = $region52
        $region51: #{tpu_custom_call.1} parent=47 // pred_region
          %340 = dma.done %s333, 128
        $region52: #{tpu_custom_call.1} parent=47 // pred_fallthru
          _
        // Predicated region
        $region53: #{tpu_custom_call.1} parent=47 // pred_check
          %p341 = pneg %p83
        $region54: #{tpu_custom_call.1} parent=47 // pred_check_branch
          %343 = sbr.rel (%p341) target = $region56
        $region55: #{tpu_custom_call.1} parent=47 // pred_region
          %344 = dma.done [#allocation14], 2048
        $region56: #{tpu_custom_call.1} parent=47 // pred_fallthru
          _
        // Predicated region
        $region57: #{tpu_custom_call.1} parent=47 // pred_check
          %p345 = pneg %p104
        $region58: #{tpu_custom_call.1} parent=47 // pred_check_branch
          %347 = sbr.rel (%p345) target = $region60
        $region59: #{tpu_custom_call.1} parent=47 // pred_region
          %348 = dma.done [#allocation14], 16
        $region60: #{tpu_custom_call.1} parent=47 // pred_fallthru
          _
        // Predicated region
        $region61: #{tpu_custom_call.1} parent=47 // pred_check
          %p349 = pneg %p125
        $region62: #{tpu_custom_call.1} parent=47 // pred_check_branch
          %351 = sbr.rel (%p349) target = $region64
        $region63: #{tpu_custom_call.1} parent=47 // pred_region
          %352 = dma.done [#allocation17], 16
        $region64: #{tpu_custom_call.1} parent=47 // pred_fallthru
          _
        // Predicated region
        $region65: #{tpu_custom_call.1} parent=47 // pred_check
          %p353 = pneg %p146
        $region66: #{tpu_custom_call.1} parent=47 // pred_check_branch
          %355 = sbr.rel (%p353) target = $region68
        $region67: #{tpu_custom_call.1} parent=47 // pred_region
          %356 = dma.done [#allocation17], 2048
        $region68: #{tpu_custom_call.1} parent=47 // pred_fallthru
          _
        // Predicated region
        $region69: #{tpu_custom_call.1} parent=47 // pred_check
          %p357 = pneg %p167
        $region70: #{tpu_custom_call.1} parent=47 // pred_check_branch
          %359 = sbr.rel (%p357) target = $region72
        $region71: #{tpu_custom_call.1} parent=47 // pred_region
          %360 = dma.done [#allocation20], 2048
        $region72: #{tpu_custom_call.1} parent=47 // pred_fallthru
          _
        // Predicated region
        $region73: #{tpu_custom_call.1} parent=47 // pred_check
          %p361 = pneg %p188
        $region74: #{tpu_custom_call.1} parent=47 // pred_check_branch
          %363 = sbr.rel (%p361) target = $region76
        $region75: #{tpu_custom_call.1} parent=47 // pred_region
          %364 = dma.done [#allocation20], 16
        $region76: #{tpu_custom_call.1} parent=47 // pred_fallthru
          _
        %s365 = sand.u32 %s49, 1
        %s366 = scalar_lea.sflag [#allocation11], %s365
        %s367 = sand.u32 %s49, 1
        %s368 = smul.addr %s367, 8
        %s369 = scalar_lea.vmem [#allocation10], %s368
        %p370 = pneg %p62
        %p371 = pneg %p59
        %p372 = pneg %p83
        %p373 = pneg %p80
        %p374 = pneg %p104
        %p375 = pneg %p101
        %p376 = pneg %p125
        %p377 = pneg %p122
        %p378 = pneg %p146
        %p379 = pneg %p143
        %p380 = pneg %p167
        %p381 = pneg %p164
        %p382 = pneg %p188
        %p383 = pneg %p185
        %p384 = pneg %p216
        %p385 = pneg %p213
        %s386 = sand.u32 %s203, 1
        %s387 = scalar_lea.sflag [#allocation12], %s386
        %s388 = sand.u32 %s203, 1
        %s389 = smul.addr %s388, 8
        %s390 = scalar_lea.vmem [#allocation22], %s389
        %s391 = sld [smem:[#allocation6 + %s41]]
        %s392 = sld [smem:[#allocation7 + %s41]]
        %s393 = sld [smem:[#allocation8 + %s41]]
        %p394 = scmp.eq.s32.totalorder %s393, 1
        // Predicated region
        $region77: #{tpu_custom_call.1} parent=47 // pred_check
          %p395 = pneg %p394
        $region78: #{tpu_custom_call.1} parent=47 // pred_check_branch
          %397 = sbr.rel (%p395) target = $region80
        $region79: #{tpu_custom_call.1} parent=47 // pred_region
          %vm398 = vcmask 0
          %399 = vst.msk [vmem:[#allocation2] sm:$0x1] %vm398, -1e+30
          %400 = vst.msk [vmem:[#allocation3] sm:$0x1] %vm398, 0.0
          %401 = vst [vmem:[#allocation4] sm:$0x1] 0.0
        $region80: #{tpu_custom_call.1} parent=47 // pred_fallthru
          _
        %v402 = vlaneseq
        %v403 = vshrl.u32 %v402, 7
        %v404 = vstv %s392
        %vm405 = vcmp.lt.s32.totalorder %v403, %v404
        %v406 = vld [vmem:[%s336] sm:$0xff]
        %v407 = vld [vmem:[#allocation13] sm:$0xff]
        %v408 = vld [vmem:[#allocation13 + $0x8] sm:$0xff]
        %v409 = vld [vmem:[#allocation13 + $0x10] sm:$0xff]
        %v410 = vld [vmem:[#allocation13 + $0x18] sm:$0xff]
        %v411 = vld [vmem:[#allocation13 + $0x20] sm:$0xff]
        %v412 = vld [vmem:[#allocation13 + $0x28] sm:$0xff]
        %v413 = vld [vmem:[#allocation13 + $0x30] sm:$0xff]
        %v414 = vld [vmem:[#allocation13 + $0x38] sm:$0xff]
        %v415 = vld [vmem:[#allocation13 + $0x40] sm:$0xff]
        %v416 = vld [vmem:[#allocation13 + $0x48] sm:$0xff]
        %v417 = vld [vmem:[#allocation13 + $0x50] sm:$0xff]
        %v418 = vld [vmem:[#allocation13 + $0x58] sm:$0xff]
        %v419 = vld [vmem:[#allocation13 + $0x60] sm:$0xff]
        %v420 = vld [vmem:[#allocation13 + $0x68] sm:$0xff]
        %v421 = vld [vmem:[#allocation13 + $0x70] sm:$0xff]
        %v422 = vld [vmem:[#allocation13 + $0x78] sm:$0xff]
        %423 = vmatprep.subr.mxu0 0.0
        %424 = vmatpush1.msra.mxu0 %v407
        %425 = vmatprep.subr.mxu0 0.0
        %426 = vmatpush1.msra.mxu0 %v408
        %427 = vmatprep.subr.mxu0 0.0
        %428 = vmatpush1.msra.mxu0 %v409
        %429 = vmatprep.subr.mxu0 0.0
        %430 = vmatpush1.msra.mxu0 %v410
        %431 = vmatprep.subr.mxu0 0.0
        %432 = vmatpush1.msra.mxu0 %v411
        %433 = vmatprep.subr.mxu0 0.0
        %434 = vmatpush1.msra.mxu0 %v412
        %435 = vmatprep.subr.mxu0 0.0
        %436 = vmatpush1.msra.mxu0 %v413
        %437 = vmatprep.subr.mxu0 0.0
        %438 = vmatpush1.msra.mxu0 %v414
        %439 = vmatprep.subr.mxu0 0.0
        %440 = vmatpush1.msra.mxu0 %v415
        %441 = vmatprep.subr.mxu0 0.0
        %442 = vmatpush1.msra.mxu0 %v416
        %443 = vmatprep.subr.mxu0 0.0
        %444 = vmatpush1.msra.mxu0 %v417
        %445 = vmatprep.subr.mxu0 0.0
        %446 = vmatpush1.msra.mxu0 %v418
        %447 = vmatprep.subr.mxu0 0.0
        %448 = vmatpush1.msra.mxu0 %v419
        %449 = vmatprep.subr.mxu0 0.0
        %450 = vmatpush1.msra.mxu0 %v420
        %451 = vmatprep.subr.mxu0 0.0
        %452 = vmatpush1.msra.mxu0 %v421
        %453 = vmatprep.subr.mxu0 0.0
        %454 = vmatpush1.msra.mxu0 %v422
        %455 = vmatprep.subr.mxu0 0.0
        %456 = vmatpush1.msra.mxu0 0.0
        %457 = vmatprep.subr.mxu0 0.0
        %458 = vmatpush1.msra.mxu0 0.0
        %459 = vmatprep.subr.mxu0 0.0
        %460 = vmatpush1.msra.mxu0 0.0
        %461 = vmatprep.subr.mxu0 0.0
        %462 = vmatpush1.msra.mxu0 0.0
        %463 = vmatprep.subr.mxu0 0.0
        %464 = vmatpush1.msra.mxu0 0.0
        %465 = vmatprep.subr.mxu0 0.0
        %466 = vmatpush1.msra.mxu0 0.0
        %467 = vmatprep.subr.mxu0 0.0
        %468 = vmatpush1.msra.mxu0 0.0
        %469 = vmatprep.subr.mxu0 0.0
        %470 = vmatpush1.msra.mxu0 0.0
        %471 = vmatprep.subr.mxu0 0.0
        %472 = vmatpush1.msra.mxu0 0.0
        %473 = vmatprep.subr.mxu0 0.0
        %474 = vmatpush1.msra.mxu0 0.0
        %475 = vmatprep.subr.mxu0 0.0
        %476 = vmatpush1.msra.mxu0 0.0
        %477 = vmatprep.subr.mxu0 0.0
        %478 = vmatpush1.msra.mxu0 0.0
        %479 = vmatprep.subr.mxu0 0.0
        %480 = vmatpush1.msra.mxu0 0.0
        %481 = vmatprep.subr.mxu0 0.0
        %482 = vmatpush1.msra.mxu0 0.0
        %483 = vmatprep.subr.mxu0 0.0
        %484 = vmatpush1.msra.mxu0 0.0
        %485 = vmatprep.subr.mxu0 0.0
        %486 = vmatpush1.msra.mxu0 0.0
        %487 = vmatprep.mubr.f32.mxu0 0.0
        %488 = vmatmul.mubr.f32.gmra.mrb[0].mxu0 %v406
        %v489 = vpop.f32.mrb[0].mxu0
        %v490 = vadd.f32 0.0, %v489
        %v491 = vpop.f32.mrb[0].mxu0
        %492 = vdwg.mxu0
        %v493 = vld [vmem:[#allocation15] sm:$0x1]
        %v495 = vlaneseq
        %v496 = vshrl.u32 %v495, 7
        %v497 = vsub.s32 0, %v496
        %v498 = vrot.slane %v493, %v497
        %v500 = vsub.f32 %v490, %v498
        %v501 = vmul.f32 %v500, %v500
        %v502 = vld [vmem:[#allocation16] sm:$0x1]
        %v504 = vlaneseq
        %v505 = vshrl.u32 %v504, 7
        %v506 = vsub.s32 0, %v505
        %v507 = vrot.slane %v502, %v506
        %v509 = vmul.f32 %v501, %v507
        %v510 = vmul.f32 %v509, 1.442695
        %v511 = vpow.pop %v510
        %v512 = vmul.f32 %v490, %v511
        %v513 = vld [vmem:[#allocation18] sm:$0xff]
        %v514 = vld [vmem:[#allocation18 + $0x8] sm:$0xff]
        %v515 = vld [vmem:[#allocation18 + $0x10] sm:$0xff]
        %v516 = vld [vmem:[#allocation18 + $0x18] sm:$0xff]
        %v517 = vld [vmem:[#allocation18 + $0x20] sm:$0xff]
        %v518 = vld [vmem:[#allocation18 + $0x28] sm:$0xff]
        %v519 = vld [vmem:[#allocation18 + $0x30] sm:$0xff]
        %v520 = vld [vmem:[#allocation18 + $0x38] sm:$0xff]
        %v521 = vld [vmem:[#allocation18 + $0x40] sm:$0xff]
        %v522 = vld [vmem:[#allocation18 + $0x48] sm:$0xff]
        %v523 = vld [vmem:[#allocation18 + $0x50] sm:$0xff]
        %v524 = vld [vmem:[#allocation18 + $0x58] sm:$0xff]
        %v525 = vld [vmem:[#allocation18 + $0x60] sm:$0xff]
        %v526 = vld [vmem:[#allocation18 + $0x68] sm:$0xff]
        %v527 = vld [vmem:[#allocation18 + $0x70] sm:$0xff]
        %v528 = vld [vmem:[#allocation18 + $0x78] sm:$0xff]
        %529 = vmatprep.subr.mxu0 0.0
        %530 = vmatpush1.msra.mxu0 %v513
        %531 = vmatprep.subr.mxu0 0.0
        %532 = vmatpush1.msra.mxu0 %v514
        %533 = vmatprep.subr.mxu0 0.0
        %534 = vmatpush1.msra.mxu0 %v515
        %535 = vmatprep.subr.mxu0 0.0
        %536 = vmatpush1.msra.mxu0 %v516
        %537 = vmatprep.subr.mxu0 0.0
        %538 = vmatpush1.msra.mxu0 %v517
        %539 = vmatprep.subr.mxu0 0.0
        %540 = vmatpush1.msra.mxu0 %v518
        %541 = vmatprep.subr.mxu0 0.0
        %542 = vmatpush1.msra.mxu0 %v519
        %543 = vmatprep.subr.mxu0 0.0
        %544 = vmatpush1.msra.mxu0 %v520
        %545 = vmatprep.subr.mxu0 0.0
        %546 = vmatpush1.msra.mxu0 %v521
        %547 = vmatprep.subr.mxu0 0.0
        %548 = vmatpush1.msra.mxu0 %v522
        %549 = vmatprep.subr.mxu0 0.0
        %550 = vmatpush1.msra.mxu0 %v523
        %551 = vmatprep.subr.mxu0 0.0
        %552 = vmatpush1.msra.mxu0 %v524
        %553 = vmatprep.subr.mxu0 0.0
        %554 = vmatpush1.msra.mxu0 %v525
        %555 = vmatprep.subr.mxu0 0.0
        %556 = vmatpush1.msra.mxu0 %v526
        %557 = vmatprep.subr.mxu0 0.0
        %558 = vmatpush1.msra.mxu0 %v527
        %559 = vmatprep.subr.mxu0 0.0
        %560 = vmatpush1.msra.mxu0 %v528
        %561 = vmatprep.subr.mxu0 0.0
        %562 = vmatpush1.msra.mxu0 0.0
        %563 = vmatprep.subr.mxu0 0.0
        %564 = vmatpush1.msra.mxu0 0.0
        %565 = vmatprep.subr.mxu0 0.0
        %566 = vmatpush1.msra.mxu0 0.0
        %567 = vmatprep.subr.mxu0 0.0
        %568 = vmatpush1.msra.mxu0 0.0
        %569 = vmatprep.subr.mxu0 0.0
        %570 = vmatpush1.msra.mxu0 0.0
        %571 = vmatprep.subr.mxu0 0.0
        %572 = vmatpush1.msra.mxu0 0.0
        %573 = vmatprep.subr.mxu0 0.0
        %574 = vmatpush1.msra.mxu0 0.0
        %575 = vmatprep.subr.mxu0 0.0
        %576 = vmatpush1.msra.mxu0 0.0
        %577 = vmatprep.subr.mxu0 0.0
        %578 = vmatpush1.msra.mxu0 0.0
        %579 = vmatprep.subr.mxu0 0.0
        %580 = vmatpush1.msra.mxu0 0.0
        %581 = vmatprep.subr.mxu0 0.0
        %582 = vmatpush1.msra.mxu0 0.0
        %583 = vmatprep.subr.mxu0 0.0
        %584 = vmatpush1.msra.mxu0 0.0
        %585 = vmatprep.subr.mxu0 0.0
        %586 = vmatpush1.msra.mxu0 0.0
        %587 = vmatprep.subr.mxu0 0.0
        %588 = vmatpush1.msra.mxu0 0.0
        %589 = vmatprep.subr.mxu0 0.0
        %590 = vmatpush1.msra.mxu0 0.0
        %591 = vmatprep.subr.mxu0 0.0
        %592 = vmatpush1.msra.mxu0 0.0
        %593 = vmatprep.mubr.f32.mxu0 0.0
        %594 = vmatmul.mubr.f32.gmra.mrb[0].mxu0 %v512
        %v595 = vpop.f32.mrb[0].mxu0
        %v596 = vadd.f32 0.0, %v595
        %v597 = vpop.f32.mrb[0].mxu0
        %598 = vdwg.mxu0
        %v599 = vld [vmem:[#allocation19] sm:$0xff]
        %v600 = vld [vmem:[#allocation19 + $0x8] sm:$0xff]
        %v601 = vld [vmem:[#allocation19 + $0x10] sm:$0xff]
        %v602 = vld [vmem:[#allocation19 + $0x18] sm:$0xff]
        %v603 = vld [vmem:[#allocation19 + $0x20] sm:$0xff]
        %v604 = vld [vmem:[#allocation19 + $0x28] sm:$0xff]
        %v605 = vld [vmem:[#allocation19 + $0x30] sm:$0xff]
        %v606 = vld [vmem:[#allocation19 + $0x38] sm:$0xff]
        %v607 = vld [vmem:[#allocation19 + $0x40] sm:$0xff]
        %v608 = vld [vmem:[#allocation19 + $0x48] sm:$0xff]
        %v609 = vld [vmem:[#allocation19 + $0x50] sm:$0xff]
        %v610 = vld [vmem:[#allocation19 + $0x58] sm:$0xff]
        %v611 = vld [vmem:[#allocation19 + $0x60] sm:$0xff]
        %v612 = vld [vmem:[#allocation19 + $0x68] sm:$0xff]
        %v613 = vld [vmem:[#allocation19 + $0x70] sm:$0xff]
        %v614 = vld [vmem:[#allocation19 + $0x78] sm:$0xff]
        %615 = vmatprep.subr.mxu0 0.0
        %616 = vmatpush1.msra.mxu0 %v599
        %617 = vmatprep.subr.mxu0 0.0
        %618 = vmatpush1.msra.mxu0 %v600
        %619 = vmatprep.subr.mxu0 0.0
        %620 = vmatpush1.msra.mxu0 %v601
        %621 = vmatprep.subr.mxu0 0.0
        %622 = vmatpush1.msra.mxu0 %v602
        %623 = vmatprep.subr.mxu0 0.0
        %624 = vmatpush1.msra.mxu0 %v603
        %625 = vmatprep.subr.mxu0 0.0
        %626 = vmatpush1.msra.mxu0 %v604
        %627 = vmatprep.subr.mxu0 0.0
        %628 = vmatpush1.msra.mxu0 %v605
        %629 = vmatprep.subr.mxu0 0.0
        %630 = vmatpush1.msra.mxu0 %v606
        %631 = vmatprep.subr.mxu0 0.0
        %632 = vmatpush1.msra.mxu0 %v607
        %633 = vmatprep.subr.mxu0 0.0
        %634 = vmatpush1.msra.mxu0 %v608
        %635 = vmatprep.subr.mxu0 0.0
        %636 = vmatpush1.msra.mxu0 %v609
        %637 = vmatprep.subr.mxu0 0.0
        %638 = vmatpush1.msra.mxu0 %v610
        %639 = vmatprep.subr.mxu0 0.0
        %640 = vmatpush1.msra.mxu0 %v611
        %641 = vmatprep.subr.mxu0 0.0
        %642 = vmatpush1.msra.mxu0 %v612
        %643 = vmatprep.subr.mxu0 0.0
        %644 = vmatpush1.msra.mxu0 %v613
        %645 = vmatprep.subr.mxu0 0.0
        %646 = vmatpush1.msra.mxu0 %v614
        %647 = vmatprep.subr.mxu0 0.0
        %648 = vmatpush1.msra.mxu0 0.0
        %649 = vmatprep.subr.mxu0 0.0
        %650 = vmatpush1.msra.mxu0 0.0
        %651 = vmatprep.subr.mxu0 0.0
        %652 = vmatpush1.msra.mxu0 0.0
        %653 = vmatprep.subr.mxu0 0.0
        %654 = vmatpush1.msra.mxu0 0.0
        %655 = vmatprep.subr.mxu0 0.0
        %656 = vmatpush1.msra.mxu0 0.0
        %657 = vmatprep.subr.mxu0 0.0
        %658 = vmatpush1.msra.mxu0 0.0
        %659 = vmatprep.subr.mxu0 0.0
        %660 = vmatpush1.msra.mxu0 0.0
        %661 = vmatprep.subr.mxu0 0.0
        %662 = vmatpush1.msra.mxu0 0.0
        %663 = vmatprep.subr.mxu0 0.0
        %664 = vmatpush1.msra.mxu0 0.0
        %665 = vmatprep.subr.mxu0 0.0
        %666 = vmatpush1.msra.mxu0 0.0
        %667 = vmatprep.subr.mxu0 0.0
        %668 = vmatpush1.msra.mxu0 0.0
        %669 = vmatprep.subr.mxu0 0.0
        %670 = vmatpush1.msra.mxu0 0.0
        %671 = vmatprep.subr.mxu0 0.0
        %672 = vmatpush1.msra.mxu0 0.0
        %673 = vmatprep.subr.mxu0 0.0
        %674 = vmatpush1.msra.mxu0 0.0
        %675 = vmatprep.subr.mxu0 0.0
        %676 = vmatpush1.msra.mxu0 0.0
        %677 = vmatprep.subr.mxu0 0.0
        %678 = vmatpush1.msra.mxu0 0.0
        %679 = vmatprep.mubr.f32.mxu0 0.0
        %680 = vmatmul.mubr.f32.gmra.mrb[0].mxu0 %v596
        %v681 = vpop.f32.mrb[0].mxu0
        %v682 = vadd.f32 0.0, %v681
        %v683 = vpop.f32.mrb[0].mxu0
        %684 = vdwg.mxu0
        %v685 = vtanh.pop %v682
        %v686 = vld [vmem:[#allocation21] sm:$0x1]
        %v688 = vlaneseq
        %v689 = vshrl.u32 %v688, 7
        %v690 = vsub.s32 0, %v689
        %v691 = vrot.slane %v686, %v690
        %v693 = vmul.f32 %v685, %v691
        %694 = vadd.xlane.f32.xlu0 %v693
        %v695 = vpop.xlane.xlu0 %694
        %v696 = vsel %vm405, %v695, -1e+30
        %v697 = vld [vmem:[#allocation2] sm:$0x1]
        %v698 = vrot.slane %v696, 4
        %v699 = vmax.f32 %v696, %v698
        %v700 = vrot.slane %v699, 2
        %v701 = vmax.f32 %v699, %v700
        %v702 = vrot.slane %v701, 1
        %v703 = vmax.f32 %v701, %v702
        %v704 = vmax.f32 %v697, %v703
        %v705 = vsub.f32 %v697, %v704
        %v706 = vmul.f32 %v705, 1.442695
        %v707 = vpow.pop %v706
        %v709 = vlaneseq
        %v710 = vshrl.u32 %v709, 7
        %v711 = vsub.s32 0, %v710
        %v712 = vrot.slane %v704, %v711
        %v714 = vsub.f32 %v696, %v712
        %v715 = vmul.f32 %v714, 1.442695
        %v716 = vpow.pop %v715
        %v717 = vsel %vm405, %v716, 0.0
        %v718 = vld [vmem:[#allocation3] sm:$0x1]
        %v719 = vmul.f32 %v707, %v718
        %vm720 = vcmask 7168
        %v721 = vsel %vm720, %v717, 0.0
        %v722 = vrot.slane %v721, 4
        %v723 = vadd.f32 %v721, %v722
        %v724 = vrot.slane %v723, 2
        %v725 = vadd.f32 %v723, %v724
        %v726 = vrot.slane %v725, 1
        %v727 = vadd.f32 %v725, %v726
        %v728 = vadd.f32 %v719, %v727
        %vm729 = vcmask 0
        %730 = vst.msk [vmem:[#allocation3] sm:$0x1] %vm729, %v728
        %v731 = vld [vmem:[#allocation4] sm:$0x1]
        %733 = vset.pattern.permute.xlu0 0
        %734 = vperm.xlu0 %733, %v707
        %v735 = vpop.permute.xlu0 %734
        %v737 = vlaneseq
        %v738 = vshrl.u32 %v737, 7
        %v739 = vsub.s32 0, %v738
        %v740 = vrot.slane %v735, %v739
        %v741 = vmul.f32 %v740, %v731
        %742 = vxpose.xlu0.b32.start [1/16] %v717, 128
        %743 = vxpose.xlu0.b32.cont [2/16] 0.0, 128
        %744 = vxpose.xlu0.b32.cont [3/16] 0.0, 128
        %745 = vxpose.xlu0.b32.cont [4/16] 0.0, 128
        %746 = vxpose.xlu0.b32.cont [5/16] 0.0, 128
        %747 = vxpose.xlu0.b32.cont [6/16] 0.0, 128
        %748 = vxpose.xlu0.b32.cont [7/16] 0.0, 128
        %749 = vxpose.xlu0.b32.cont [8/16] 0.0, 128
        %750 = vxpose.xlu0.b32.cont [9/16] 0.0, 128
        %751 = vxpose.xlu0.b32.cont [10/16] 0.0, 128
        %752 = vxpose.xlu0.b32.cont [11/16] 0.0, 128
        %753 = vxpose.xlu0.b32.cont [12/16] 0.0, 128
        %754 = vxpose.xlu0.b32.cont [13/16] 0.0, 128
        %755 = vxpose.xlu0.b32.cont [14/16] 0.0, 128
        %756 = vxpose.xlu0.b32.cont [15/16] 0.0, 128
        %757 = vxpose.xlu0.b32.end [16/16] 0.0, 128
        %v758 = vpop.trf.xlu0
        %v759 = vpop.trf.xlu0
        %v760 = vpop.trf.xlu0
        %v761 = vpop.trf.xlu0
        %v762 = vpop.trf.xlu0
        %v763 = vpop.trf.xlu0
        %v764 = vpop.trf.xlu0
        %v765 = vpop.trf.xlu0
        %v766 = vpop.trf.xlu0
        %v767 = vpop.trf.xlu0
        %v768 = vpop.trf.xlu0
        %v769 = vpop.trf.xlu0
        %v770 = vpop.trf.xlu0
        %v771 = vpop.trf.xlu0
        %v772 = vpop.trf.xlu0
        %v773 = vpop.trf.xlu0
        %vm774 = vcmask 64512
        %v776 = vsel %vm774, %v758, 0
        %778 = vmatprep.subr.mxu0 0.0
        %779 = vmatpush1.msra.mxu0 %v596
        %780 = vmatprep.subr.mxu0 0.0
        %781 = vmatpush1.msra.mxu0 0.0
        %782 = vmatprep.subr.mxu0 0.0
        %783 = vmatpush1.msra.mxu0 0.0
        %784 = vmatprep.subr.mxu0 0.0
        %785 = vmatpush1.msra.mxu0 0.0
        %786 = vmatprep.subr.mxu0 0.0
        %787 = vmatpush1.msra.mxu0 0.0
        %788 = vmatprep.subr.mxu0 0.0
        %789 = vmatpush1.msra.mxu0 0.0
        %790 = vmatprep.subr.mxu0 0.0
        %791 = vmatpush1.msra.mxu0 0.0
        %792 = vmatprep.subr.mxu0 0.0
        %793 = vmatpush1.msra.mxu0 0.0
        %794 = vmatprep.subr.mxu0 0.0
        %795 = vmatpush1.msra.mxu0 0.0
        %796 = vmatprep.subr.mxu0 0.0
        %797 = vmatpush1.msra.mxu0 0.0
        %798 = vmatprep.subr.mxu0 0.0
        %799 = vmatpush1.msra.mxu0 0.0
        %800 = vmatprep.subr.mxu0 0.0
        %801 = vmatpush1.msra.mxu0 0.0
        %802 = vmatprep.subr.mxu0 0.0
        %803 = vmatpush1.msra.mxu0 0.0
        %804 = vmatprep.subr.mxu0 0.0
        %805 = vmatpush1.msra.mxu0 0.0
        %806 = vmatprep.subr.mxu0 0.0
        %807 = vmatpush1.msra.mxu0 0.0
        %808 = vmatprep.subr.mxu0 0.0
        %809 = vmatpush1.msra.mxu0 0.0
        %810 = vmatprep.subr.mxu0 0.0
        %811 = vmatpush1.msra.mxu0 0.0
        %812 = vmatprep.subr.mxu0 0.0
        %813 = vmatpush1.msra.mxu0 0.0
        %814 = vmatprep.subr.mxu0 0.0
        %815 = vmatpush1.msra.mxu0 0.0
        %816 = vmatprep.subr.mxu0 0.0
        %817 = vmatpush1.msra.mxu0 0.0
        %818 = vmatprep.subr.mxu0 0.0
        %819 = vmatpush1.msra.mxu0 0.0
        %820 = vmatprep.subr.mxu0 0.0
        %821 = vmatpush1.msra.mxu0 0.0
        %822 = vmatprep.subr.mxu0 0.0
        %823 = vmatpush1.msra.mxu0 0.0
        %824 = vmatprep.subr.mxu0 0.0
        %825 = vmatpush1.msra.mxu0 0.0
        %826 = vmatprep.subr.mxu0 0.0
        %827 = vmatpush1.msra.mxu0 0.0
        %828 = vmatprep.subr.mxu0 0.0
        %829 = vmatpush1.msra.mxu0 0.0
        %830 = vmatprep.subr.mxu0 0.0
        %831 = vmatpush1.msra.mxu0 0.0
        %832 = vmatprep.subr.mxu0 0.0
        %833 = vmatpush1.msra.mxu0 0.0
        %834 = vmatprep.subr.mxu0 0.0
        %835 = vmatpush1.msra.mxu0 0.0
        %836 = vmatprep.subr.mxu0 0.0
        %837 = vmatpush1.msra.mxu0 0.0
        %838 = vmatprep.subr.mxu0 0.0
        %839 = vmatpush1.msra.mxu0 0.0
        %840 = vmatprep.subr.mxu0 0.0
        %841 = vmatpush1.msra.mxu0 0.0
        %842 = vmatprep.mubr.f32.mxu0 0.0
        %843 = vmatmul.mubr.f32.gmra.mrb[0].mxu0 %v776
        %v844 = vpop.f32.mrb[0].mxu0
        %v845 = vadd.f32 0.0, %v844
        %v846 = vpop.f32.mrb[0].mxu0
        %847 = vdwg.mxu0
        %v848 = vadd.f32 %v741, %v845
        %849 = vst [vmem:[#allocation4] sm:$0x1] %v848
        %850 = vst.msk [vmem:[#allocation2] sm:$0x1] %vm729, %v704
        %s851 = sld [smem:[#allocation9 + %s41]]
        %p852 = scmp.eq.s32.totalorder %s851, 1
        // Predicated region
        $region81: #{tpu_custom_call.1} parent=47 // pred_check
          %p853 = pneg %p852
        $region82: #{tpu_custom_call.1} parent=47 // pred_check_branch
          %855 = sbr.rel (%p853) target = $region84
        $region83: #{tpu_custom_call.1} parent=47 // pred_region
          %v856 = vld [vmem:[#allocation4] sm:$0x1]
          %v857 = vld [vmem:[#allocation3] sm:$0x1]
          %v858 = vadd.f32 %v857, 1e-16
          %v859 = vrcp.pop %v858
          %v860 = vmul.f32 1.0, %v859
          %862 = vset.pattern.permute.xlu0 0
          %863 = vperm.xlu0 %862, %v860
          %v864 = vpop.permute.xlu0 %863
          %v866 = vlaneseq
          %v867 = vshrl.u32 %v866, 7
          %v868 = vsub.s32 0, %v867
          %v869 = vrot.slane %v864, %v868
          %v870 = vmul.f32 %v856, %v869
          %v872 = vlaneseq
          %v873 = vshrl.u32 %v872, 7
          %v874 = vsub.s32 0, %v873
          %v875 = vrot.slane %v870, %v874
          %877 = vst [vmem:[%s390] sm:$0xff] %v875
        $region84: #{tpu_custom_call.1} parent=47 // pred_fallthru
          _
        %s878 = sand.u32 %s203, 1
        %s879 = scalar_lea.sflag [#allocation12], %s878
        %s880 = sand.u32 %s203, 1
        %s881 = smul.addr %s880, 8
        %s882 = scalar_lea.vmem [#allocation22], %s881
        // Predicated region
        $region85: #{tpu_custom_call.1} parent=47 // pred_check
          %p883 = pneg %p213
        $region86: #{tpu_custom_call.1} parent=47 // pred_check_branch
          %885 = sbr.rel (%p883) target = $region88
        $region87: #{tpu_custom_call.1} parent=47 // pred_region
          %s886 = sld [smem:[#allocation6 + %s41]]
          %s888 = ssub.s32 128, 128
          %889 = vsyncadd %s879, %s888
          %s890 = smul.addr %s886, 128
          %s891 = scalar_lea.hbm %s11, %s890
          %s893 = sshll.u32 %s882, 4
          %s894 = int_to_ptr.vmem [resolvable:$true] %s893
          %896 = dma.vmem_to_hbm [thread:$0]  %s894, 128, %s891, %s879
        $region88: #{tpu_custom_call.1} parent=47 // pred_fallthru
          _
      $region48: #{tpu_custom_call.1} parent=5 // pred_fallthru
        _
      %p897 = scmp.le.s32.totalorder 2, %s36
      // Predicated region
      $region89: #{tpu_custom_call.1} parent=5 // pred_check
        %p898 = pneg %p897
      $region90: #{tpu_custom_call.1} parent=5 // pred_check_branch
        %900 = sbr.rel (%p898) target = $region92
      $region91: #{tpu_custom_call.1} parent=5 // pred_region
        %s901 = ssub.s32 %s36, 2
        // Predicated region
        $region93: #{tpu_custom_call.1} parent=91 // pred_check
          %p902 = pneg %p219
        $region94: #{tpu_custom_call.1} parent=91 // pred_check_branch
          %904 = sbr.rel (%p902) target = $region96
        $region95: #{tpu_custom_call.1} parent=91 // pred_region
          %s905 = sand.u32 %s204, 1
          %s906 = scalar_lea.sflag [#allocation12], %s905
          %s907 = sand.u32 %s204, 1
          %s908 = smul.addr %s907, 8
          %s909 = scalar_lea.vmem [#allocation22], %s908
          %910 = dma.done %s906, 128
        $region96: #{tpu_custom_call.1} parent=91 // pred_fallthru
          _
      $region92: #{tpu_custom_call.1} parent=5 // pred_fallthru
        _
    $region6: #{tpu_custom_call.1} parent=1 // loop_footer
      %s40 = sadd.s32 1, %s36
    $region7: #{tpu_custom_call.1} parent=1 // loop_footer_branch
      %35 = sbr.rel target = $region3
    $region8: #{tpu_custom_call.1} parent=1 // loop_exit
      _
    %911 = vsyncpa [#allocation11], 1
    %s912 = scalar_lea.sflag [#allocation11], 1
    %913 = vsyncpa %s912, 1
    %914 = vsyncpa [#allocation14], 1
    %915 = vsyncpa [#allocation17], 1
    %916 = vsyncpa [#allocation20], 1
    %917 = vsyncpa [#allocation12], 1
    %s918 = scalar_lea.sflag [#allocation12], 1
    %919 = vsyncpa %s918, 1

// kernel: tpu_custom_call.1
$region0: #{tpu_custom_call.1}
  #allocation0 [shape = 'u32[]', space=smem, size = 0x4, offset = 0x4, fixed_abs, tag = 'smem constant byte address 0x4 - core index']
  #allocation1 [shape = 'u32[144,128]{1,0:T(1,128)}', space=vmem, size = 0x12000, scoped, tag = 'internal scratch']
  #allocation2 [shape = 'f32[1,1]{1,0:T(1,128)}', space=vmem, size = 0x200, scoped, tag = 'scratch operand']
  #allocation3 [shape = 'f32[1,1]{1,0:T(1,128)}', space=vmem, size = 0x200, scoped, tag = 'scratch operand']
  #allocation4 [shape = 'f32[1,128]{1,0:T(1,128)}', space=vmem, size = 0x200, scoped, tag = 'scratch operand']
  #allocation5 [shape = 's32[1]{0}', space=sflag, size = 0x4, scoped, tag = 'scoped memory for tpu_custom_call.1']
  #allocation6 [shape = 'u8[512]{0}', space=smem, size = 0x200, scoped, tag = 'prefetched SMEM operand 0']
  #allocation7 [shape = 'u8[512]{0}', space=smem, size = 0x200, scoped, tag = 'prefetched SMEM operand 1']
  #allocation8 [shape = 'u8[512]{0}', space=smem, size = 0x200, scoped, tag = 'prefetched SMEM operand 2']
  #allocation9 [shape = 'u8[512]{0}', space=smem, size = 0x200, scoped, tag = 'prefetched SMEM operand 3']
  %s0 = inlined_call_operand.hbm [shape: s32[3], index: 0, kind: input, shape index: {}]
  %s1 = inlined_call_operand.hbm [shape: s32[3], index: 1, kind: input, shape index: {}]
  %s2 = inlined_call_operand.hbm [shape: s32[3], index: 2, kind: input, shape index: {}]
  %s3 = inlined_call_operand.hbm [shape: s32[3], index: 3, kind: input, shape index: {}]
  %s4 = inlined_call_operand.hbm [shape: f32[24,128], index: 4, kind: input, shape index: {}]
  %s5 = inlined_call_operand.hbm [shape: f32[128,128], index: 5, kind: input, shape index: {}]
  %s6 = inlined_call_operand.hbm [shape: f32[1,128], index: 6, kind: input, shape index: {}]
  %s7 = inlined_call_operand.hbm [shape: f32[1,128], index: 7, kind: input, shape index: {}]
  %s8 = inlined_call_operand.hbm [shape: f32[128,128], index: 8, kind: input, shape index: {}]
  %s9 = inlined_call_operand.hbm [shape: f32[128,128], index: 9, kind: input, shape index: {}]
  %s10 = inlined_call_operand.hbm [shape: f32[1,128], index: 10, kind: input, shape index: {}]
  %s11 = inlined_call_operand.hbm [shape: f32[16,128], index: 11, kind: output, shape index: {}]
  %s12 = sld [smem:[#allocation0]]
  $region97: #{tpu_custom_call.1} parent=0
    _
  %s14 = ssub.s32 1, %s12
  %s15 = scalar_select 0, %s14, %s12
  %17 = dma.hbm_to_smem %s0, 16, [#allocation6], [#allocation5]
  %19 = dma.hbm_to_smem %s1, 16, [#allocation7], [#allocation5]
  %21 = dma.hbm_to_smem %s2, 16, [#allocation8], [#allocation5]
  %23 = dma.hbm_to_smem %s3, 16, [#allocation9], [#allocation5]
  %24 = dma.done [#allocation5], 64
  %25 = sfence
  $region1: #{tpu_custom_call.1} parent=0
    #allocation10 [shape = 'u8[8192]{0}', space=vmem, size = 0x2000, scoped, tag = 'input window, operand 4']
    #allocation11 [shape = 's32[2]{0}', space=sflag, size = 0x8, scoped, tag = 'scoped memory for tpu_custom_call.1']
    #allocation12 [shape = 's32[2]{0}', space=sflag, size = 0x8, scoped, tag = 'scoped memory for tpu_custom_call.1']
    #allocation13 [shape = 'u8[65536]{0}', space=vmem, size = 0x10000, scoped, tag = 'input window, operand 5, single buffered']
    #allocation14 [shape = 's32[1]{0}', space=sflag, size = 0x4, scoped, tag = 'scoped memory for tpu_custom_call.1']
    #allocation15 [shape = 'u8[512]{0}', space=vmem, size = 0x400, scoped, tag = 'input window, operand 6, single buffered']
    #allocation16 [shape = 'u8[512]{0}', space=vmem, size = 0x400, scoped, tag = 'input window, operand 7, single buffered']
    #allocation17 [shape = 's32[1]{0}', space=sflag, size = 0x4, scoped, tag = 'scoped memory for tpu_custom_call.1']
    #allocation18 [shape = 'u8[65536]{0}', space=vmem, size = 0x10000, scoped, tag = 'input window, operand 8, single buffered']
    #allocation19 [shape = 'u8[65536]{0}', space=vmem, size = 0x10000, scoped, tag = 'input window, operand 9, single buffered']
    #allocation20 [shape = 's32[1]{0}', space=sflag, size = 0x4, scoped, tag = 'scoped memory for tpu_custom_call.1']
    #allocation21 [shape = 'u8[512]{0}', space=vmem, size = 0x400, scoped, tag = 'input window, operand 10, single buffered']
    #allocation22 [shape = 'u8[8192]{0}', space=vmem, size = 0x2000, scoped, tag = 'output window, operand 0']
    %26 = vsyncpa [#allocation11], 0
    %s27 = scalar_lea.sflag [#allocation11], 1
    %28 = vsyncpa %s27, 0
    %29 = vsyncpa [#allocation14], 0
    %30 = vsyncpa [#allocation17], 0
    %31 = vsyncpa [#allocation20], 0
    %32 = vsyncpa [#allocation12], 0
    %s33 = scalar_lea.sflag [#allocation12], 1
    %34 = vsyncpa %s33, 0
    loop: start=0, step=1, limit=5
    $region2: #{tpu_custom_call.1} parent=1 // loop_pre_header
      _
    $region3: #{tpu_custom_call.1} parent=1 // loop_header
      %s36 = sphi 0, %s40
      %p37 = scmp.ge.s32.totalorder %s36, 5
      %s46 = sphi 0, %s48
      %s49 = sphi 0, %s46
      %s50 = sphi 0, %s49
      %s66 = sphi 0, %s50
      %s70 = sphi 0, %s70
      %s72 = sphi 0, %s70
      %s73 = sphi 0, %s72
      %s87 = sphi 0, %s73
      %s91 = sphi 0, %s91
      %s93 = sphi 0, %s91
      %s94 = sphi 0, %s93
      %s108 = sphi 0, %s94
      %s112 = sphi 0, %s112
      %s114 = sphi 0, %s112
      %s115 = sphi 0, %s114
      %s129 = sphi 0, %s115
      %s133 = sphi 0, %s133
      %s135 = sphi 0, %s133
      %s136 = sphi 0, %s135
      %s150 = sphi 0, %s136
      %s154 = sphi 0, %s154
      %s156 = sphi 0, %s154
      %s157 = sphi 0, %s156
      %s171 = sphi 0, %s157
      %s175 = sphi 0, %s175
      %s177 = sphi 0, %s175
      %s178 = sphi 0, %s177
      %s192 = sphi 0, %s178
      %s200 = sphi 0, %s202
      %s203 = sphi 0, %s200
      %s204 = sphi 0, %s203
      %s220 = sphi 0, %s204
    $region4: #{tpu_custom_call.1} parent=1 // loop_header_branch
      %39 = sbr.rel (%p37) target = $region8
    $region5: #{tpu_custom_call.1} parent=1 // loop_body
      %s41 = ssub.s32 %s36, 1
      %s42 = ssub.s32 %s36, 2
      %s43 = sadd.s32 %s36, 1
      %s44 = ssub.s32 %s36, %s43
      %p45 = scmp.eq.s32.totalorder %s44, 0
      %s47 = sadd.s32 %s46, 1
      %s48 = scalar_select %p45, %s46, %s47
      %p51 = pneg %p45
      %p52 = scmp.eq.s32.totalorder %s36, 2
      %p53 = por %p51, %p52
      %p54 = scmp.ne.s32.totalorder %s46, %s49
      %p55 = scmp.eq.s32.totalorder %s36, 0
      %p56 = por %p54, %p55
      %p57 = scmp.ne.s32.totalorder %s46, %s49
      %p58 = scmp.eq.s32.totalorder %s41, 2
      %p59 = por %p57, %p58
      %p60 = scmp.ne.s32.totalorder %s49, %s50
      %p61 = scmp.eq.s32.totalorder %s41, 0
      %p62 = por %p60, %p61
      %p63 = scmp.ne.s32.totalorder %s49, %s50
      %p64 = scmp.eq.s32.totalorder %s42, 2
      %p65 = por %p63, %p64
      %p67 = scmp.ne.s32.totalorder %s50, %s66
      %p68 = scmp.eq.s32.totalorder %s42, 0
      %p69 = por %p67, %p68
      %s71 = sadd.s32 %s70, 1
      %p74 = scmp.eq.s32.totalorder %s36, 2
      %p75 = scmp.ne.s32.totalorder %s70, %s72
      %p76 = scmp.eq.s32.totalorder %s36, 0
      %p77 = por %p75, %p76
      %p78 = scmp.ne.s32.totalorder %s70, %s72
      %p79 = scmp.eq.s32.totalorder %s41, 2
      %p80 = por %p78, %p79
      %p81 = scmp.ne.s32.totalorder %s72, %s73
      %p82 = scmp.eq.s32.totalorder %s41, 0
      %p83 = por %p81, %p82
      %p84 = scmp.ne.s32.totalorder %s72, %s73
      %p85 = scmp.eq.s32.totalorder %s42, 2
      %p86 = por %p84, %p85
      %p88 = scmp.ne.s32.totalorder %s73, %s87
      %p89 = scmp.eq.s32.totalorder %s42, 0
      %p90 = por %p88, %p89
      %s92 = sadd.s32 %s91, 1
      %p95 = scmp.eq.s32.totalorder %s36, 2
      %p96 = scmp.ne.s32.totalorder %s91, %s93
      %p97 = scmp.eq.s32.totalorder %s36, 0
      %p98 = por %p96, %p97
      %p99 = scmp.ne.s32.totalorder %s91, %s93
      %p100 = scmp.eq.s32.totalorder %s41, 2
      %p101 = por %p99, %p100
      %p102 = scmp.ne.s32.totalorder %s93, %s94
      %p103 = scmp.eq.s32.totalorder %s41, 0
      %p104 = por %p102, %p103
      %p105 = scmp.ne.s32.totalorder %s93, %s94
      %p106 = scmp.eq.s32.totalorder %s42, 2
      %p107 = por %p105, %p106
      %p109 = scmp.ne.s32.totalorder %s94, %s108
      %p110 = scmp.eq.s32.totalorder %s42, 0
      %p111 = por %p109, %p110
      %s113 = sadd.s32 %s112, 1
      %p116 = scmp.eq.s32.totalorder %s36, 2
      %p117 = scmp.ne.s32.totalorder %s112, %s114
      %p118 = scmp.eq.s32.totalorder %s36, 0
      %p119 = por %p117, %p118
      %p120 = scmp.ne.s32.totalorder %s112, %s114
      %p121 = scmp.eq.s32.totalorder %s41, 2
      %p122 = por %p120, %p121
      %p123 = scmp.ne.s32.totalorder %s114, %s115
      %p124 = scmp.eq.s32.totalorder %s41, 0
      %p125 = por %p123, %p124
      %p126 = scmp.ne.s32.totalorder %s114, %s115
      %p127 = scmp.eq.s32.totalorder %s42, 2
      %p128 = por %p126, %p127
      %p130 = scmp.ne.s32.totalorder %s115, %s129
      %p131 = scmp.eq.s32.totalorder %s42, 0
      %p132 = por %p130, %p131
      %s134 = sadd.s32 %s133, 1
      %p137 = scmp.eq.s32.totalorder %s36, 2
      %p138 = scmp.ne.s32.totalorder %s133, %s135
      %p139 = scmp.eq.s32.totalorder %s36, 0
      %p140 = por %p138, %p139
      %p141 = scmp.ne.s32.totalorder %s133, %s135
      %p142 = scmp.eq.s32.totalorder %s41, 2
      %p143 = por %p141, %p142
      %p144 = scmp.ne.s32.totalorder %s135, %s136
      %p145 = scmp.eq.s32.totalorder %s41, 0
      %p146 = por %p144, %p145
      %p147 = scmp.ne.s32.totalorder %s135, %s136
      %p148 = scmp.eq.s32.totalorder %s42, 2
      %p149 = por %p147, %p148
      %p151 = scmp.ne.s32.totalorder %s136, %s150
      %p152 = scmp.eq.s32.totalorder %s42, 0
      %p153 = por %p151, %p152
      %s155 = sadd.s32 %s154, 1
      %p158 = scmp.eq.s32.totalorder %s36, 2
      %p159 = scmp.ne.s32.totalorder %s154, %s156
      %p160 = scmp.eq.s32.totalorder %s36, 0
      %p161 = por %p159, %p160
      %p162 = scmp.ne.s32.totalorder %s154, %s156
      %p163 = scmp.eq.s32.totalorder %s41, 2
      %p164 = por %p162, %p163
      %p165 = scmp.ne.s32.totalorder %s156, %s157
      %p166 = scmp.eq.s32.totalorder %s41, 0
      %p167 = por %p165, %p166
      %p168 = scmp.ne.s32.totalorder %s156, %s157
      %p169 = scmp.eq.s32.totalorder %s42, 2
      %p170 = por %p168, %p169
      %p172 = scmp.ne.s32.totalorder %s157, %s171
      %p173 = scmp.eq.s32.totalorder %s42, 0
      %p174 = por %p172, %p173
      %s176 = sadd.s32 %s175, 1
      %p179 = scmp.eq.s32.totalorder %s36, 2
      %p180 = scmp.ne.s32.totalorder %s175, %s177
      %p181 = scmp.eq.s32.totalorder %s36, 0
      %p182 = por %p180, %p181
      %p183 = scmp.ne.s32.totalorder %s175, %s177
      %p184 = scmp.eq.s32.totalorder %s41, 2
      %p185 = por %p183, %p184
      %p186 = scmp.ne.s32.totalorder %s177, %s178
      %p187 = scmp.eq.s32.totalorder %s41, 0
      %p188 = por %p186, %p187
      %p189 = scmp.ne.s32.totalorder %s177, %s178
      %p190 = scmp.eq.s32.totalorder %s42, 2
      %p191 = por %p189, %p190
      %p193 = scmp.ne.s32.totalorder %s178, %s192
      %p194 = scmp.eq.s32.totalorder %s42, 0
      %p195 = por %p193, %p194
      %s196 = sld [smem:[#allocation6 + %s36]]
      %s197 = sld [smem:[#allocation6 + %s43]]
      %s198 = ssub.s32 %s196, %s197
      %p199 = scmp.eq.s32.totalorder %s198, 0
      %s201 = sadd.s32 %s200, 1
      %s202 = scalar_select %p199, %s200, %s201
      %p205 = pneg %p199
      %p206 = scmp.eq.s32.totalorder %s36, 2
      %p207 = por %p205, %p206
      %p208 = scmp.ne.s32.totalorder %s200, %s203
      %p209 = scmp.eq.s32.totalorder %s36, 0
      %p210 = por %p208, %p209
      %p211 = scmp.ne.s32.totalorder %s200, %s203
      %p212 = scmp.eq.s32.totalorder %s41, 2
      %p213 = por %p211, %p212
      %p214 = scmp.ne.s32.totalorder %s203, %s204
      %p215 = scmp.eq.s32.totalorder %s41, 0
      %p216 = por %p214, %p215
      %p217 = scmp.ne.s32.totalorder %s203, %s204
      %p218 = scmp.eq.s32.totalorder %s42, 2
      %p219 = por %p217, %p218
      %p221 = scmp.ne.s32.totalorder %s204, %s220
      %p222 = scmp.eq.s32.totalorder %s42, 0
      %p223 = por %p221, %p222
      %p224 = scmp.le.s32.totalorder 1, %s36
      %p225 = scmp.lt.s32.totalorder %s36, 4
      %p226 = pnand %p224, %p225
      %p227 = pneg %p226
      // Predicated region
      $region9: #{tpu_custom_call.1} parent=5 // pred_check
        _
      $region10: #{tpu_custom_call.1} parent=5 // pred_check_branch
        %229 = sbr.rel (%p226) target = $region12
      $region11: #{tpu_custom_call.1} parent=5 // pred_region
        %s230 = ssub.s32 %s36, 1
        // Predicated region
        $region13: #{tpu_custom_call.1} parent=11 // pred_check
          %p231 = pneg %p83
        $region14: #{tpu_custom_call.1} parent=11 // pred_check_branch
          %233 = sbr.rel (%p231) target = $region16
        $region15: #{tpu_custom_call.1} parent=11 // pred_region
          %s235 = ssub.s32 2048, 2048
          %236 = vsyncadd [#allocation14], %s235
          %s237 = sshll.u32 [#allocation13], 4
          %s238 = int_to_ptr.vmem [resolvable:$true] %s237
          %243 = dma.hbm_to_vmem [thread:$0]  %s5, 2048, %s238, [#allocation14], 128, 128, 8
        $region16: #{tpu_custom_call.1} parent=11 // pred_fallthru
          _
        // Predicated region
        $region17: #{tpu_custom_call.1} parent=11 // pred_check
          %p244 = pneg %p104
        $region18: #{tpu_custom_call.1} parent=11 // pred_check_branch
          %246 = sbr.rel (%p244) target = $region20
        $region19: #{tpu_custom_call.1} parent=11 // pred_region
          %s248 = ssub.s32 16, 16
          %249 = vsyncadd [#allocation14], %s248
          %s251 = sshll.u32 [#allocation15], 4
          %s252 = int_to_ptr.vmem [resolvable:$true] %s251
          %254 = dma.hbm_to_vmem [thread:$0]  %s6, 16, %s252, [#allocation14]
        $region20: #{tpu_custom_call.1} parent=11 // pred_fallthru
          _
        // Predicated region
        $region21: #{tpu_custom_call.1} parent=11 // pred_check
          %p255 = pneg %p125
        $region22: #{tpu_custom_call.1} parent=11 // pred_check_branch
          %257 = sbr.rel (%p255) target = $region24
        $region23: #{tpu_custom_call.1} parent=11 // pred_region
          %s259 = ssub.s32 16, 16
          %260 = vsyncadd [#allocation17], %s259
          %s262 = sshll.u32 [#allocation16], 4
          %s263 = int_to_ptr.vmem [resolvable:$true] %s262
          %265 = dma.hbm_to_vmem [thread:$0]  %s7, 16, %s263, [#allocation17]
        $region24: #{tpu_custom_call.1} parent=11 // pred_fallthru
          _
        // Predicated region
        $region25: #{tpu_custom_call.1} parent=11 // pred_check
          %p266 = pneg %p146
        $region26: #{tpu_custom_call.1} parent=11 // pred_check_branch
          %268 = sbr.rel (%p266) target = $region28
        $region27: #{tpu_custom_call.1} parent=11 // pred_region
          %s270 = ssub.s32 2048, 2048
          %271 = vsyncadd [#allocation17], %s270
          %s272 = sshll.u32 [#allocation18], 4
          %s273 = int_to_ptr.vmem [resolvable:$true] %s272
          %278 = dma.hbm_to_vmem [thread:$0]  %s8, 2048, %s273, [#allocation17], 128, 128, 8
        $region28: #{tpu_custom_call.1} parent=11 // pred_fallthru
          _
        // Predicated region
        $region29: #{tpu_custom_call.1} parent=11 // pred_check
          %p279 = pneg %p167
        $region30: #{tpu_custom_call.1} parent=11 // pred_check_branch
          %281 = sbr.rel (%p279) target = $region32
        $region31: #{tpu_custom_call.1} parent=11 // pred_region
          %s283 = ssub.s32 2048, 2048
          %284 = vsyncadd [#allocation20], %s283
          %s285 = sshll.u32 [#allocation19], 4
          %s286 = int_to_ptr.vmem [resolvable:$true] %s285
          %291 = dma.hbm_to_vmem [thread:$0]  %s9, 2048, %s286, [#allocation20], 128, 128, 8
        $region32: #{tpu_custom_call.1} parent=11 // pred_fallthru
          _
        // Predicated region
        $region33: #{tpu_custom_call.1} parent=11 // pred_check
          %p292 = pneg %p188
        $region34: #{tpu_custom_call.1} parent=11 // pred_check_branch
          %294 = sbr.rel (%p292) target = $region36
        $region35: #{tpu_custom_call.1} parent=11 // pred_region
          %s296 = ssub.s32 16, 16
          %297 = vsyncadd [#allocation20], %s296
          %s299 = sshll.u32 [#allocation21], 4
          %s300 = int_to_ptr.vmem [resolvable:$true] %s299
          %302 = dma.hbm_to_vmem [thread:$0]  %s10, 16, %s300, [#allocation20]
        $region36: #{tpu_custom_call.1} parent=11 // pred_fallthru
          _
      $region12: #{tpu_custom_call.1} parent=5 // pred_fallthru
        _
      %p303 = scmp.lt.s32.totalorder %s36, 3
      // Predicated region
      $region37: #{tpu_custom_call.1} parent=5 // pred_check
        %p304 = pneg %p303
      $region38: #{tpu_custom_call.1} parent=5 // pred_check_branch
        %306 = sbr.rel (%p304) target = $region40
      $region39: #{tpu_custom_call.1} parent=5 // pred_region
        // Predicated region
        $region41: #{tpu_custom_call.1} parent=39 // pred_check
          %p307 = pneg %p56
        $region42: #{tpu_custom_call.1} parent=39 // pred_check_branch
          %309 = sbr.rel (%p307) target = $region44
        $region43: #{tpu_custom_call.1} parent=39 // pred_region
          %s310 = sand.u32 %s46, 1
          %s311 = scalar_lea.sflag [#allocation11], %s310
          %s312 = sand.u32 %s46, 1
          %s313 = smul.addr %s312, 8
          %s314 = scalar_lea.vmem [#allocation10], %s313
          %s316 = ssub.s32 128, 128
          %317 = vsyncadd %s311, %s316
          %s318 = smul.addr %s36, 128
          %s319 = scalar_lea.hbm %s4, %s318
          %s321 = sshll.u32 %s314, 4
          %s322 = int_to_ptr.vmem [resolvable:$true] %s321
          %324 = dma.hbm_to_vmem [thread:$0]  %s319, 128, %s322, %s311
        $region44: #{tpu_custom_call.1} parent=39 // pred_fallthru
          _
      $region40: #{tpu_custom_call.1} parent=5 // pred_fallthru
        _
      %p325 = scmp.le.s32.totalorder 1, %s36
      %p326 = scmp.lt.s32.totalorder %s36, 4
      %p327 = pnand %p325, %p326
      %p328 = pneg %p327
      // Predicated region
      $region45: #{tpu_custom_call.1} parent=5 // pred_check
        _
      $region46: #{tpu_custom_call.1} parent=5 // pred_check_branch
        %330 = sbr.rel (%p327) target = $region48
      $region47: #{tpu_custom_call.1} parent=5 // pred_region
        %s331 = ssub.s32 %s36, 1
        %s332 = sand.u32 %s49, 1
        %s333 = scalar_lea.sflag [#allocation11], %s332
        %s334 = sand.u32 %s49, 1
        %s335 = smul.addr %s334, 8
        %s336 = scalar_lea.vmem [#allocation10], %s335
        // Predicated region
        $region49: #{tpu_custom_call.1} parent=47 // pred_check
          %p337 = pneg %p62
        $region50: #{tpu_custom_call.1} parent=47 // pred_check_branch
          %339 = sbr.rel (%p337) target = $region52
        $region51: #{tpu_custom_call.1} parent=47 // pred_region
          %340 = dma.done %s333, 128
        $region52: #{tpu_custom_call.1} parent=47 // pred_fallthru
          _
        // Predicated region
        $region53: #{tpu_custom_call.1} parent=47 // pred_check
          %p341 = pneg %p83
        $region54: #{tpu_custom_call.1} parent=47 // pred_check_branch
          %343 = sbr.rel (%p341) target = $region56
        $region55: #{tpu_custom_call.1} parent=47 // pred_region
          %344 = dma.done [#allocation14], 2048
        $region56: #{tpu_custom_call.1} parent=47 // pred_fallthru
          _
        // Predicated region
        $region57: #{tpu_custom_call.1} parent=47 // pred_check
          %p345 = pneg %p104
        $region58: #{tpu_custom_call.1} parent=47 // pred_check_branch
          %347 = sbr.rel (%p345) target = $region60
        $region59: #{tpu_custom_call.1} parent=47 // pred_region
          %348 = dma.done [#allocation14], 16
        $region60: #{tpu_custom_call.1} parent=47 // pred_fallthru
          _
        // Predicated region
        $region61: #{tpu_custom_call.1} parent=47 // pred_check
          %p349 = pneg %p125
        $region62: #{tpu_custom_call.1} parent=47 // pred_check_branch
          %351 = sbr.rel (%p349) target = $region64
        $region63: #{tpu_custom_call.1} parent=47 // pred_region
          %352 = dma.done [#allocation17], 16
        $region64: #{tpu_custom_call.1} parent=47 // pred_fallthru
          _
        // Predicated region
        $region65: #{tpu_custom_call.1} parent=47 // pred_check
          %p353 = pneg %p146
        $region66: #{tpu_custom_call.1} parent=47 // pred_check_branch
          %355 = sbr.rel (%p353) target = $region68
        $region67: #{tpu_custom_call.1} parent=47 // pred_region
          %356 = dma.done [#allocation17], 2048
        $region68: #{tpu_custom_call.1} parent=47 // pred_fallthru
          _
        // Predicated region
        $region69: #{tpu_custom_call.1} parent=47 // pred_check
          %p357 = pneg %p167
        $region70: #{tpu_custom_call.1} parent=47 // pred_check_branch
          %359 = sbr.rel (%p357) target = $region72
        $region71: #{tpu_custom_call.1} parent=47 // pred_region
          %360 = dma.done [#allocation20], 2048
        $region72: #{tpu_custom_call.1} parent=47 // pred_fallthru
          _
        // Predicated region
        $region73: #{tpu_custom_call.1} parent=47 // pred_check
          %p361 = pneg %p188
        $region74: #{tpu_custom_call.1} parent=47 // pred_check_branch
          %363 = sbr.rel (%p361) target = $region76
        $region75: #{tpu_custom_call.1} parent=47 // pred_region
          %364 = dma.done [#allocation20], 16
        $region76: #{tpu_custom_call.1} parent=47 // pred_fallthru
          _
        %s365 = sand.u32 %s49, 1
        %s366 = scalar_lea.sflag [#allocation11], %s365
        %s367 = sand.u32 %s49, 1
        %s368 = smul.addr %s367, 8
        %s369 = scalar_lea.vmem [#allocation10], %s368
        %p370 = pneg %p62
        %p371 = pneg %p59
        %p372 = pneg %p83
        %p373 = pneg %p80
        %p374 = pneg %p104
        %p375 = pneg %p101
        %p376 = pneg %p125
        %p377 = pneg %p122
        %p378 = pneg %p146
        %p379 = pneg %p143
        %p380 = pneg %p167
        %p381 = pneg %p164
        %p382 = pneg %p188
        %p383 = pneg %p185
        %p384 = pneg %p216
        %p385 = pneg %p213
        %s386 = sand.u32 %s203, 1
        %s387 = scalar_lea.sflag [#allocation12], %s386
        %s388 = sand.u32 %s203, 1
        %s389 = smul.addr %s388, 8
        %s390 = scalar_lea.vmem [#allocation22], %s389
        %s391 = sld [smem:[#allocation6 + %s41]]
        %s392 = sld [smem:[#allocation7 + %s41]]
        %s393 = sld [smem:[#allocation8 + %s41]]
        %p394 = scmp.eq.s32.totalorder %s393, 1
        // Predicated region
        $region77: #{tpu_custom_call.1} parent=47 // pred_check
          %p395 = pneg %p394
        $region78: #{tpu_custom_call.1} parent=47 // pred_check_branch
          %397 = sbr.rel (%p395) target = $region80
        $region79: #{tpu_custom_call.1} parent=47 // pred_region
          %vm398 = vcmask 0
          %399 = vst.msk [vmem:[#allocation2] sm:$0x1] %vm398, -1e+30
          %400 = vst.msk [vmem:[#allocation3] sm:$0x1] %vm398, 0.0
          %401 = vst [vmem:[#allocation4] sm:$0x1] 0.0
        $region80: #{tpu_custom_call.1} parent=47 // pred_fallthru
          _
        %v402 = vlaneseq
        %v403 = vshrl.u32 %v402, 7
        %v404 = vstv %s392
        %vm405 = vcmp.lt.s32.totalorder %v403, %v404
        %v406 = vld [vmem:[%s336] sm:$0xff]
        %v407 = vld [vmem:[#allocation13] sm:$0xff]
        %v408 = vld [vmem:[#allocation13 + $0x8] sm:$0xff]
        %v409 = vld [vmem:[#allocation13 + $0x10] sm:$0xff]
        %v410 = vld [vmem:[#allocation13 + $0x18] sm:$0xff]
        %v411 = vld [vmem:[#allocation13 + $0x20] sm:$0xff]
        %v412 = vld [vmem:[#allocation13 + $0x28] sm:$0xff]
        %v413 = vld [vmem:[#allocation13 + $0x30] sm:$0xff]
        %v414 = vld [vmem:[#allocation13 + $0x38] sm:$0xff]
        %v415 = vld [vmem:[#allocation13 + $0x40] sm:$0xff]
        %v416 = vld [vmem:[#allocation13 + $0x48] sm:$0xff]
        %v417 = vld [vmem:[#allocation13 + $0x50] sm:$0xff]
        %v418 = vld [vmem:[#allocation13 + $0x58] sm:$0xff]
        %v419 = vld [vmem:[#allocation13 + $0x60] sm:$0xff]
        %v420 = vld [vmem:[#allocation13 + $0x68] sm:$0xff]
        %v421 = vld [vmem:[#allocation13 + $0x70] sm:$0xff]
        %v422 = vld [vmem:[#allocation13 + $0x78] sm:$0xff]
        %423 = vmatprep.subr.mxu0 0.0
        %424 = vmatpush1.msra.mxu0 %v407
        %425 = vmatprep.subr.mxu0 0.0
        %426 = vmatpush1.msra.mxu0 %v408
        %427 = vmatprep.subr.mxu0 0.0
        %428 = vmatpush1.msra.mxu0 %v409
        %429 = vmatprep.subr.mxu0 0.0
        %430 = vmatpush1.msra.mxu0 %v410
        %431 = vmatprep.subr.mxu0 0.0
        %432 = vmatpush1.msra.mxu0 %v411
        %433 = vmatprep.subr.mxu0 0.0
        %434 = vmatpush1.msra.mxu0 %v412
        %435 = vmatprep.subr.mxu0 0.0
        %436 = vmatpush1.msra.mxu0 %v413
        %437 = vmatprep.subr.mxu0 0.0
        %438 = vmatpush1.msra.mxu0 %v414
        %439 = vmatprep.subr.mxu0 0.0
        %440 = vmatpush1.msra.mxu0 %v415
        %441 = vmatprep.subr.mxu0 0.0
        %442 = vmatpush1.msra.mxu0 %v416
        %443 = vmatprep.subr.mxu0 0.0
        %444 = vmatpush1.msra.mxu0 %v417
        %445 = vmatprep.subr.mxu0 0.0
        %446 = vmatpush1.msra.mxu0 %v418
        %447 = vmatprep.subr.mxu0 0.0
        %448 = vmatpush1.msra.mxu0 %v419
        %449 = vmatprep.subr.mxu0 0.0
        %450 = vmatpush1.msra.mxu0 %v420
        %451 = vmatprep.subr.mxu0 0.0
        %452 = vmatpush1.msra.mxu0 %v421
        %453 = vmatprep.subr.mxu0 0.0
        %454 = vmatpush1.msra.mxu0 %v422
        %455 = vmatprep.subr.mxu0 0.0
        %456 = vmatpush1.msra.mxu0 0.0
        %457 = vmatprep.subr.mxu0 0.0
        %458 = vmatpush1.msra.mxu0 0.0
        %459 = vmatprep.subr.mxu0 0.0
        %460 = vmatpush1.msra.mxu0 0.0
        %461 = vmatprep.subr.mxu0 0.0
        %462 = vmatpush1.msra.mxu0 0.0
        %463 = vmatprep.subr.mxu0 0.0
        %464 = vmatpush1.msra.mxu0 0.0
        %465 = vmatprep.subr.mxu0 0.0
        %466 = vmatpush1.msra.mxu0 0.0
        %467 = vmatprep.subr.mxu0 0.0
        %468 = vmatpush1.msra.mxu0 0.0
        %469 = vmatprep.subr.mxu0 0.0
        %470 = vmatpush1.msra.mxu0 0.0
        %471 = vmatprep.subr.mxu0 0.0
        %472 = vmatpush1.msra.mxu0 0.0
        %473 = vmatprep.subr.mxu0 0.0
        %474 = vmatpush1.msra.mxu0 0.0
        %475 = vmatprep.subr.mxu0 0.0
        %476 = vmatpush1.msra.mxu0 0.0
        %477 = vmatprep.subr.mxu0 0.0
        %478 = vmatpush1.msra.mxu0 0.0
        %479 = vmatprep.subr.mxu0 0.0
        %480 = vmatpush1.msra.mxu0 0.0
        %481 = vmatprep.subr.mxu0 0.0
        %482 = vmatpush1.msra.mxu0 0.0
        %483 = vmatprep.subr.mxu0 0.0
        %484 = vmatpush1.msra.mxu0 0.0
        %485 = vmatprep.subr.mxu0 0.0
        %486 = vmatpush1.msra.mxu0 0.0
        %487 = vmatprep.mubr.f32.mxu0 0.0
        %488 = vmatmul.mubr.f32.gmra.mrb[0].mxu0 %v406
        %v489 = vpop.f32.mrb[0].mxu0
        %v490 = vadd.f32 0.0, %v489
        %v491 = vpop.f32.mrb[0].mxu0
        %492 = vdwg.mxu0
        %v493 = vld [vmem:[#allocation15] sm:$0x1]
        %v495 = vlaneseq
        %v496 = vshrl.u32 %v495, 7
        %v497 = vsub.s32 0, %v496
        %v498 = vrot.slane %v493, %v497
        %v500 = vsub.f32 %v490, %v498
        %v501 = vmul.f32 %v500, %v500
        %v502 = vld [vmem:[#allocation16] sm:$0x1]
        %v504 = vlaneseq
        %v505 = vshrl.u32 %v504, 7
        %v506 = vsub.s32 0, %v505
        %v507 = vrot.slane %v502, %v506
        %v509 = vmul.f32 %v501, %v507
        %v510 = vmul.f32 %v509, 1.442695
        %v511 = vpow.pop %v510
        %v512 = vmul.f32 %v490, %v511
        %v513 = vld [vmem:[#allocation18] sm:$0xff]
        %v514 = vld [vmem:[#allocation18 + $0x8] sm:$0xff]
        %v515 = vld [vmem:[#allocation18 + $0x10] sm:$0xff]
        %v516 = vld [vmem:[#allocation18 + $0x18] sm:$0xff]
        %v517 = vld [vmem:[#allocation18 + $0x20] sm:$0xff]
        %v518 = vld [vmem:[#allocation18 + $0x28] sm:$0xff]
        %v519 = vld [vmem:[#allocation18 + $0x30] sm:$0xff]
        %v520 = vld [vmem:[#allocation18 + $0x38] sm:$0xff]
        %v521 = vld [vmem:[#allocation18 + $0x40] sm:$0xff]
        %v522 = vld [vmem:[#allocation18 + $0x48] sm:$0xff]
        %v523 = vld [vmem:[#allocation18 + $0x50] sm:$0xff]
        %v524 = vld [vmem:[#allocation18 + $0x58] sm:$0xff]
        %v525 = vld [vmem:[#allocation18 + $0x60] sm:$0xff]
        %v526 = vld [vmem:[#allocation18 + $0x68] sm:$0xff]
        %v527 = vld [vmem:[#allocation18 + $0x70] sm:$0xff]
        %v528 = vld [vmem:[#allocation18 + $0x78] sm:$0xff]
        %529 = vmatprep.subr.mxu0 0.0
        %530 = vmatpush1.msra.mxu0 %v513
        %531 = vmatprep.subr.mxu0 0.0
        %532 = vmatpush1.msra.mxu0 %v514
        %533 = vmatprep.subr.mxu0 0.0
        %534 = vmatpush1.msra.mxu0 %v515
        %535 = vmatprep.subr.mxu0 0.0
        %536 = vmatpush1.msra.mxu0 %v516
        %537 = vmatprep.subr.mxu0 0.0
        %538 = vmatpush1.msra.mxu0 %v517
        %539 = vmatprep.subr.mxu0 0.0
        %540 = vmatpush1.msra.mxu0 %v518
        %541 = vmatprep.subr.mxu0 0.0
        %542 = vmatpush1.msra.mxu0 %v519
        %543 = vmatprep.subr.mxu0 0.0
        %544 = vmatpush1.msra.mxu0 %v520
        %545 = vmatprep.subr.mxu0 0.0
        %546 = vmatpush1.msra.mxu0 %v521
        %547 = vmatprep.subr.mxu0 0.0
        %548 = vmatpush1.msra.mxu0 %v522
        %549 = vmatprep.subr.mxu0 0.0
        %550 = vmatpush1.msra.mxu0 %v523
        %551 = vmatprep.subr.mxu0 0.0
        %552 = vmatpush1.msra.mxu0 %v524
        %553 = vmatprep.subr.mxu0 0.0
        %554 = vmatpush1.msra.mxu0 %v525
        %555 = vmatprep.subr.mxu0 0.0
        %556 = vmatpush1.msra.mxu0 %v526
        %557 = vmatprep.subr.mxu0 0.0
        %558 = vmatpush1.msra.mxu0 %v527
        %559 = vmatprep.subr.mxu0 0.0
        %560 = vmatpush1.msra.mxu0 %v528
        %561 = vmatprep.subr.mxu0 0.0
        %562 = vmatpush1.msra.mxu0 0.0
        %563 = vmatprep.subr.mxu0 0.0
        %564 = vmatpush1.msra.mxu0 0.0
        %565 = vmatprep.subr.mxu0 0.0
        %566 = vmatpush1.msra.mxu0 0.0
        %567 = vmatprep.subr.mxu0 0.0
        %568 = vmatpush1.msra.mxu0 0.0
        %569 = vmatprep.subr.mxu0 0.0
        %570 = vmatpush1.msra.mxu0 0.0
        %571 = vmatprep.subr.mxu0 0.0
        %572 = vmatpush1.msra.mxu0 0.0
        %573 = vmatprep.subr.mxu0 0.0
        %574 = vmatpush1.msra.mxu0 0.0
        %575 = vmatprep.subr.mxu0 0.0
        %576 = vmatpush1.msra.mxu0 0.0
        %577 = vmatprep.subr.mxu0 0.0
        %578 = vmatpush1.msra.mxu0 0.0
        %579 = vmatprep.subr.mxu0 0.0
        %580 = vmatpush1.msra.mxu0 0.0
        %581 = vmatprep.subr.mxu0 0.0
        %582 = vmatpush1.msra.mxu0 0.0
        %583 = vmatprep.subr.mxu0 0.0
        %584 = vmatpush1.msra.mxu0 0.0
        %585 = vmatprep.subr.mxu0 0.0
        %586 = vmatpush1.msra.mxu0 0.0
        %587 = vmatprep.subr.mxu0 0.0
        %588 = vmatpush1.msra.mxu0 0.0
        %589 = vmatprep.subr.mxu0 0.0
        %590 = vmatpush1.msra.mxu0 0.0
        %591 = vmatprep.subr.mxu0 0.0
        %592 = vmatpush1.msra.mxu0 0.0
        %593 = vmatprep.mubr.f32.mxu0 0.0
        %594 = vmatmul.mubr.f32.gmra.mrb[0].mxu0 %v512
        %v595 = vpop.f32.mrb[0].mxu0
        %v596 = vadd.f32 0.0, %v595
        %v597 = vpop.f32.mrb[0].mxu0
        %598 = vdwg.mxu0
        %v599 = vld [vmem:[#allocation19] sm:$0xff]
        %v600 = vld [vmem:[#allocation19 + $0x8] sm:$0xff]
        %v601 = vld [vmem:[#allocation19 + $0x10] sm:$0xff]
        %v602 = vld [vmem:[#allocation19 + $0x18] sm:$0xff]
        %v603 = vld [vmem:[#allocation19 + $0x20] sm:$0xff]
        %v604 = vld [vmem:[#allocation19 + $0x28] sm:$0xff]
        %v605 = vld [vmem:[#allocation19 + $0x30] sm:$0xff]
        %v606 = vld [vmem:[#allocation19 + $0x38] sm:$0xff]
        %v607 = vld [vmem:[#allocation19 + $0x40] sm:$0xff]
        %v608 = vld [vmem:[#allocation19 + $0x48] sm:$0xff]
        %v609 = vld [vmem:[#allocation19 + $0x50] sm:$0xff]
        %v610 = vld [vmem:[#allocation19 + $0x58] sm:$0xff]
        %v611 = vld [vmem:[#allocation19 + $0x60] sm:$0xff]
        %v612 = vld [vmem:[#allocation19 + $0x68] sm:$0xff]
        %v613 = vld [vmem:[#allocation19 + $0x70] sm:$0xff]
        %v614 = vld [vmem:[#allocation19 + $0x78] sm:$0xff]
        %615 = vmatprep.subr.mxu0 0.0
        %616 = vmatpush1.msra.mxu0 %v599
        %617 = vmatprep.subr.mxu0 0.0
        %618 = vmatpush1.msra.mxu0 %v600
        %619 = vmatprep.subr.mxu0 0.0
        %620 = vmatpush1.msra.mxu0 %v601
        %621 = vmatprep.subr.mxu0 0.0
        %622 = vmatpush1.msra.mxu0 %v602
        %623 = vmatprep.subr.mxu0 0.0
        %624 = vmatpush1.msra.mxu0 %v603
        %625 = vmatprep.subr.mxu0 0.0
        %626 = vmatpush1.msra.mxu0 %v604
        %627 = vmatprep.subr.mxu0 0.0
        %628 = vmatpush1.msra.mxu0 %v605
        %629 = vmatprep.subr.mxu0 0.0
        %630 = vmatpush1.msra.mxu0 %v606
        %631 = vmatprep.subr.mxu0 0.0
        %632 = vmatpush1.msra.mxu0 %v607
        %633 = vmatprep.subr.mxu0 0.0
        %634 = vmatpush1.msra.mxu0 %v608
        %635 = vmatprep.subr.mxu0 0.0
        %636 = vmatpush1.msra.mxu0 %v609
        %637 = vmatprep.subr.mxu0 0.0
        %638 = vmatpush1.msra.mxu0 %v610
        %639 = vmatprep.subr.mxu0 0.0
        %640 = vmatpush1.msra.mxu0 %v611
        %641 = vmatprep.subr.mxu0 0.0
        %642 = vmatpush1.msra.mxu0 %v612
        %643 = vmatprep.subr.mxu0 0.0
        %644 = vmatpush1.msra.mxu0 %v613
        %645 = vmatprep.subr.mxu0 0.0
        %646 = vmatpush1.msra.mxu0 %v614
        %647 = vmatprep.subr.mxu0 0.0
        %648 = vmatpush1.msra.mxu0 0.0
        %649 = vmatprep.subr.mxu0 0.0
        %650 = vmatpush1.msra.mxu0 0.0
        %651 = vmatprep.subr.mxu0 0.0
        %652 = vmatpush1.msra.mxu0 0.0
        %653 = vmatprep.subr.mxu0 0.0
        %654 = vmatpush1.msra.mxu0 0.0
        %655 = vmatprep.subr.mxu0 0.0
        %656 = vmatpush1.msra.mxu0 0.0
        %657 = vmatprep.subr.mxu0 0.0
        %658 = vmatpush1.msra.mxu0 0.0
        %659 = vmatprep.subr.mxu0 0.0
        %660 = vmatpush1.msra.mxu0 0.0
        %661 = vmatprep.subr.mxu0 0.0
        %662 = vmatpush1.msra.mxu0 0.0
        %663 = vmatprep.subr.mxu0 0.0
        %664 = vmatpush1.msra.mxu0 0.0
        %665 = vmatprep.subr.mxu0 0.0
        %666 = vmatpush1.msra.mxu0 0.0
        %667 = vmatprep.subr.mxu0 0.0
        %668 = vmatpush1.msra.mxu0 0.0
        %669 = vmatprep.subr.mxu0 0.0
        %670 = vmatpush1.msra.mxu0 0.0
        %671 = vmatprep.subr.mxu0 0.0
        %672 = vmatpush1.msra.mxu0 0.0
        %673 = vmatprep.subr.mxu0 0.0
        %674 = vmatpush1.msra.mxu0 0.0
        %675 = vmatprep.subr.mxu0 0.0
        %676 = vmatpush1.msra.mxu0 0.0
        %677 = vmatprep.subr.mxu0 0.0
        %678 = vmatpush1.msra.mxu0 0.0
        %679 = vmatprep.mubr.f32.mxu0 0.0
        %680 = vmatmul.mubr.f32.gmra.mrb[0].mxu0 %v596
        %v681 = vpop.f32.mrb[0].mxu0
        %v682 = vadd.f32 0.0, %v681
        %v683 = vpop.f32.mrb[0].mxu0
        %684 = vdwg.mxu0
        %v685 = vtanh.pop %v682
        %v686 = vld [vmem:[#allocation21] sm:$0x1]
        %v688 = vlaneseq
        %v689 = vshrl.u32 %v688, 7
        %v690 = vsub.s32 0, %v689
        %v691 = vrot.slane %v686, %v690
        %v693 = vmul.f32 %v685, %v691
        %694 = vadd.xlane.f32.xlu0 %v693
        %v695 = vpop.xlane.xlu0 %694
        %v696 = vsel %vm405, %v695, -1e+30
        %v697 = vld [vmem:[#allocation2] sm:$0x1]
        %v698 = vrot.slane %v696, 4
        %v699 = vmax.f32 %v696, %v698
        %v700 = vrot.slane %v699, 2
        %v701 = vmax.f32 %v699, %v700
        %v702 = vrot.slane %v701, 1
        %v703 = vmax.f32 %v701, %v702
        %v704 = vmax.f32 %v697, %v703
        %v705 = vsub.f32 %v697, %v704
        %v706 = vmul.f32 %v705, 1.442695
        %v707 = vpow.pop %v706
        %v709 = vlaneseq
        %v710 = vshrl.u32 %v709, 7
        %v711 = vsub.s32 0, %v710
        %v712 = vrot.slane %v704, %v711
        %v714 = vsub.f32 %v696, %v712
        %v715 = vmul.f32 %v714, 1.442695
        %v716 = vpow.pop %v715
        %v717 = vsel %vm405, %v716, 0.0
        %v718 = vld [vmem:[#allocation3] sm:$0x1]
        %v719 = vmul.f32 %v707, %v718
        %vm720 = vcmask 7168
        %v721 = vsel %vm720, %v717, 0.0
        %v722 = vrot.slane %v721, 4
        %v723 = vadd.f32 %v721, %v722
        %v724 = vrot.slane %v723, 2
        %v725 = vadd.f32 %v723, %v724
        %v726 = vrot.slane %v725, 1
        %v727 = vadd.f32 %v725, %v726
        %v728 = vadd.f32 %v719, %v727
        %vm729 = vcmask 0
        %730 = vst.msk [vmem:[#allocation3] sm:$0x1] %vm729, %v728
        %v731 = vld [vmem:[#allocation4] sm:$0x1]
        %733 = vset.pattern.permute.xlu0 0
        %734 = vperm.xlu0 %733, %v707
        %v735 = vpop.permute.xlu0 %734
        %v737 = vlaneseq
        %v738 = vshrl.u32 %v737, 7
        %v739 = vsub.s32 0, %v738
        %v740 = vrot.slane %v735, %v739
        %v741 = vmul.f32 %v740, %v731
        %742 = vxpose.xlu0.b32.start [1/16] %v717, 128
        %743 = vxpose.xlu0.b32.cont [2/16] 0.0, 128
        %744 = vxpose.xlu0.b32.cont [3/16] 0.0, 128
        %745 = vxpose.xlu0.b32.cont [4/16] 0.0, 128
        %746 = vxpose.xlu0.b32.cont [5/16] 0.0, 128
        %747 = vxpose.xlu0.b32.cont [6/16] 0.0, 128
        %748 = vxpose.xlu0.b32.cont [7/16] 0.0, 128
        %749 = vxpose.xlu0.b32.cont [8/16] 0.0, 128
        %750 = vxpose.xlu0.b32.cont [9/16] 0.0, 128
        %751 = vxpose.xlu0.b32.cont [10/16] 0.0, 128
        %752 = vxpose.xlu0.b32.cont [11/16] 0.0, 128
        %753 = vxpose.xlu0.b32.cont [12/16] 0.0, 128
        %754 = vxpose.xlu0.b32.cont [13/16] 0.0, 128
        %755 = vxpose.xlu0.b32.cont [14/16] 0.0, 128
        %756 = vxpose.xlu0.b32.cont [15/16] 0.0, 128
        %757 = vxpose.xlu0.b32.end [16/16] 0.0, 128
        %v758 = vpop.trf.xlu0
        %v759 = vpop.trf.xlu0
        %v760 = vpop.trf.xlu0
        %v761 = vpop.trf.xlu0
        %v762 = vpop.trf.xlu0
        %v763 = vpop.trf.xlu0
        %v764 = vpop.trf.xlu0
        %v765 = vpop.trf.xlu0
        %v766 = vpop.trf.xlu0
        %v767 = vpop.trf.xlu0
        %v768 = vpop.trf.xlu0
        %v769 = vpop.trf.xlu0
        %v770 = vpop.trf.xlu0
        %v771 = vpop.trf.xlu0
        %v772 = vpop.trf.xlu0
        %v773 = vpop.trf.xlu0
        %vm774 = vcmask 64512
        %v776 = vsel %vm774, %v758, 0
        %778 = vmatprep.subr.mxu0 0.0
        %779 = vmatpush1.msra.mxu0 %v596
        %780 = vmatprep.subr.mxu0 0.0
        %781 = vmatpush1.msra.mxu0 0.0
        %782 = vmatprep.subr.mxu0 0.0
        %783 = vmatpush1.msra.mxu0 0.0
        %784 = vmatprep.subr.mxu0 0.0
        %785 = vmatpush1.msra.mxu0 0.0
        %786 = vmatprep.subr.mxu0 0.0
        %787 = vmatpush1.msra.mxu0 0.0
        %788 = vmatprep.subr.mxu0 0.0
        %789 = vmatpush1.msra.mxu0 0.0
        %790 = vmatprep.subr.mxu0 0.0
        %791 = vmatpush1.msra.mxu0 0.0
        %792 = vmatprep.subr.mxu0 0.0
        %793 = vmatpush1.msra.mxu0 0.0
        %794 = vmatprep.subr.mxu0 0.0
        %795 = vmatpush1.msra.mxu0 0.0
        %796 = vmatprep.subr.mxu0 0.0
        %797 = vmatpush1.msra.mxu0 0.0
        %798 = vmatprep.subr.mxu0 0.0
        %799 = vmatpush1.msra.mxu0 0.0
        %800 = vmatprep.subr.mxu0 0.0
        %801 = vmatpush1.msra.mxu0 0.0
        %802 = vmatprep.subr.mxu0 0.0
        %803 = vmatpush1.msra.mxu0 0.0
        %804 = vmatprep.subr.mxu0 0.0
        %805 = vmatpush1.msra.mxu0 0.0
        %806 = vmatprep.subr.mxu0 0.0
        %807 = vmatpush1.msra.mxu0 0.0
        %808 = vmatprep.subr.mxu0 0.0
        %809 = vmatpush1.msra.mxu0 0.0
        %810 = vmatprep.subr.mxu0 0.0
        %811 = vmatpush1.msra.mxu0 0.0
        %812 = vmatprep.subr.mxu0 0.0
        %813 = vmatpush1.msra.mxu0 0.0
        %814 = vmatprep.subr.mxu0 0.0
        %815 = vmatpush1.msra.mxu0 0.0
        %816 = vmatprep.subr.mxu0 0.0
        %817 = vmatpush1.msra.mxu0 0.0
        %818 = vmatprep.subr.mxu0 0.0
        %819 = vmatpush1.msra.mxu0 0.0
        %820 = vmatprep.subr.mxu0 0.0
        %821 = vmatpush1.msra.mxu0 0.0
        %822 = vmatprep.subr.mxu0 0.0
        %823 = vmatpush1.msra.mxu0 0.0
        %824 = vmatprep.subr.mxu0 0.0
        %825 = vmatpush1.msra.mxu0 0.0
        %826 = vmatprep.subr.mxu0 0.0
        %827 = vmatpush1.msra.mxu0 0.0
        %828 = vmatprep.subr.mxu0 0.0
        %829 = vmatpush1.msra.mxu0 0.0
        %830 = vmatprep.subr.mxu0 0.0
        %831 = vmatpush1.msra.mxu0 0.0
        %832 = vmatprep.subr.mxu0 0.0
        %833 = vmatpush1.msra.mxu0 0.0
        %834 = vmatprep.subr.mxu0 0.0
        %835 = vmatpush1.msra.mxu0 0.0
        %836 = vmatprep.subr.mxu0 0.0
        %837 = vmatpush1.msra.mxu0 0.0
        %838 = vmatprep.subr.mxu0 0.0
        %839 = vmatpush1.msra.mxu0 0.0
        %840 = vmatprep.subr.mxu0 0.0
        %841 = vmatpush1.msra.mxu0 0.0
        %842 = vmatprep.mubr.f32.mxu0 0.0
        %843 = vmatmul.mubr.f32.gmra.mrb[0].mxu0 %v776
        %v844 = vpop.f32.mrb[0].mxu0
        %v845 = vadd.f32 0.0, %v844
        %v846 = vpop.f32.mrb[0].mxu0
        %847 = vdwg.mxu0
        %v848 = vadd.f32 %v741, %v845
        %849 = vst [vmem:[#allocation4] sm:$0x1] %v848
        %850 = vst.msk [vmem:[#allocation2] sm:$0x1] %vm729, %v704
        %s851 = sld [smem:[#allocation9 + %s41]]
        %p852 = scmp.eq.s32.totalorder %s851, 1
        // Predicated region
        $region81: #{tpu_custom_call.1} parent=47 // pred_check
          %p853 = pneg %p852
        $region82: #{tpu_custom_call.1} parent=47 // pred_check_branch
          %855 = sbr.rel (%p853) target = $region84
        $region83: #{tpu_custom_call.1} parent=47 // pred_region
          %v856 = vld [vmem:[#allocation4] sm:$0x1]
          %v857 = vld [vmem:[#allocation3] sm:$0x1]
          %v858 = vadd.f32 %v857, 1e-16
          %v859 = vrcp.pop %v858
          %v860 = vmul.f32 1.0, %v859
          %862 = vset.pattern.permute.xlu0 0
          %863 = vperm.xlu0 %862, %v860
          %v864 = vpop.permute.xlu0 %863
          %v866 = vlaneseq
          %v867 = vshrl.u32 %v866, 7
          %v868 = vsub.s32 0, %v867
          %v869 = vrot.slane %v864, %v868
          %v870 = vmul.f32 %v856, %v869
          %v872 = vlaneseq
          %v873 = vshrl.u32 %v872, 7
          %v874 = vsub.s32 0, %v873
          %v875 = vrot.slane %v870, %v874
          %877 = vst [vmem:[%s390] sm:$0xff] %v875
        $region84: #{tpu_custom_call.1} parent=47 // pred_fallthru
          _
        %s878 = sand.u32 %s203, 1
        %s879 = scalar_lea.sflag [#allocation12], %s878
        %s880 = sand.u32 %s203, 1
        %s881 = smul.addr %s880, 8
        %s882 = scalar_lea.vmem [#allocation22], %s881
        // Predicated region
        $region85: #{tpu_custom_call.1} parent=47 // pred_check
          %p883 = pneg %p213
        $region86: #{tpu_custom_call.1} parent=47 // pred_check_branch
          %885 = sbr.rel (%p883) target = $region88
        $region87: #{tpu_custom_call.1} parent=47 // pred_region
          %s886 = sld [smem:[#allocation6 + %s41]]
          %s888 = ssub.s32 128, 128
          %889 = vsyncadd %s879, %s888
          %s890 = smul.addr %s886, 128
          %s891 = scalar_lea.hbm %s11, %s890
          %s893 = sshll.u32 %s882, 4
          %s894 = int_to_ptr.vmem [resolvable:$true] %s893
          %896 = dma.vmem_to_hbm [thread:$0]  %s894, 128, %s891, %s879
        $region88: #{tpu_custom_call.1} parent=47 // pred_fallthru
          _
      $region48: #{tpu_custom_call.1} parent=5 // pred_fallthru
        _
      %p897 = scmp.le.s32.totalorder 2, %s36
      // Predicated region
      $region89: #{tpu_custom_call.1} parent=5 // pred_check
        %p898 = pneg %p897
      $region90: #{tpu_custom_call.1} parent=5 // pred_check_branch
        %900 = sbr.rel (%p898) target = $region92
      $region91: #{tpu_custom_call.1} parent=5 // pred_region
        %s901 = ssub.s32 %s36, 2
        // Predicated region
        $region93: #{tpu_custom_call.1} parent=91 // pred_check
          %p902 = pneg %p219
        $region94: #{tpu_custom_call.1} parent=91 // pred_check_branch
          %904 = sbr.rel (%p902) target = $region96
        $region95: #{tpu_custom_call.1} parent=91 // pred_region
          %s905 = sand.u32 %s204, 1
          %s906 = scalar_lea.sflag [#allocation12], %s905
          %s907 = sand.u32 %s204, 1
          %s908 = smul.addr %s907, 8
          %s909 = scalar_lea.vmem [#allocation22], %s908
          %910 = dma.done %s906, 128
        $region96: #{tpu_custom_call.1} parent=91 // pred_fallthru
          _
      $region92: #{tpu_custom_call.1} parent=5 // pred_fallthru
        _
    $region6: #{tpu_custom_call.1} parent=1 // loop_footer
      %s40 = sadd.s32 1, %s36
    $region7: #{tpu_custom_call.1} parent=1 // loop_footer_branch
      %35 = sbr.rel target = $region3
    $region8: #{tpu_custom_call.1} parent=1 // loop_exit
      _
    %911 = vsyncpa [#allocation11], 1
    %s912 = scalar_lea.sflag [#allocation11], 1
    %913 = vsyncpa %s912, 1
    %914 = vsyncpa [#allocation14], 1
    %915 = vsyncpa [#allocation17], 1
    %916 = vsyncpa [#allocation20], 1
    %917 = vsyncpa [#allocation12], 1
    %s918 = scalar_lea.sflag [#allocation12], 1
    %919 = vsyncpa %s918, 1

</llo_original>
